<compile_context>
chip_gen: v6e
topology: v6e:2x2x1
jax: 0.10.0
libtpu: 0.0.40
codegen_flags: <defaults>
</compile_context>

<pallas_src>
import functools

import jax
import jax.numpy as jnp
from jax.experimental import pallas as pl
from jax.experimental.pallas import tpu as pltpu

LRELU_SLOPE = 0.1
_HALO = 16                      # halo rows staged per tile (>= max (K-1)//stride)
_VMEM_BUDGETS = None


def _round_up(x, m):
    return ((x + m - 1) // m) * m


def _vmem_budgets():
    """(kernel working-set budget, vmem_limit_bytes) derived from the chip."""
    global _VMEM_BUDGETS
    if _VMEM_BUDGETS is None:
        cap = 64 * 1024 * 1024          # conservative default (v7x per-core VMEM)
        try:
            info = pltpu.get_tpu_info()
            cap = int(getattr(info, "vmem_capacity_bytes", cap)) or cap
        except Exception:
            pass
        budget = min(int(cap * 0.55), 72 * 1024 * 1024)
        limit = min(int(cap * 0.75), 100 * 1024 * 1024)
        _VMEM_BUDGETS = (budget, limit)
    return _VMEM_BUDGETS


# -----------------------------------------------------------------------------
# Pallas kernel: tap-accumulating channels-last conv tile
#   xm:  (tm, stride*Ct)      main input tile (stride phases folded into lanes)
#   xh:  (16, stride*Ct)      halo rows (next tile's head, clamped at the end)
#   w:   (Gp, K, CLp, Npk)    packed block-diagonal weights, VMEM-resident
#   b:   (1, Np)              bias
#   o:   (tm, Np)             output tile (channels-last)
#   slab:(tm+16, stride*Ct)   VMEM scratch so every tap is a plain VMEM load
# -----------------------------------------------------------------------------
def _conv_tap_kernel(xm_ref, xh_ref, w_ref, b_ref, o_ref, slab_ref, *,
                     num_taps, stride, num_packs, clp, npk, ct, apply_lrelu):
    tm = o_ref.shape[0]
    hb = xh_ref.shape[0]
    slab_ref[0:tm, :] = xm_ref[...]
    slab_ref[tm:tm + hb, :] = xh_ref[...]
    for g in range(num_packs):
        acc = jnp.zeros((tm, npk), jnp.float32)
        for k in range(num_taps):
            q, r = k // stride, k % stride
            lo = r * ct + g * clp
            a = slab_ref[q:q + tm, lo:lo + clp]              # (tm, CLp)
            acc = acc + jnp.dot(a, w_ref[g, k],
                                preferred_element_type=jnp.float32)
        res = acc + b_ref[:, g * npk:(g + 1) * npk].astype(jnp.float32)
        if apply_lrelu:
            res = jnp.maximum(res, LRELU_SLOPE * res)        # 2 VPU ops
        o_ref[:, g * npk:(g + 1) * npk] = res.astype(o_ref.dtype)


# -----------------------------------------------------------------------------
# Channels-last conv1d wrapper (also used for the (K,1) conv2d of DiscriminatorP
# after folding the pointwise period axis into the batch).
# -----------------------------------------------------------------------------
def conv1d_cl(x, w, b, stride, padding, groups, lrelu,
              out_dtype=jnp.bfloat16, max_rows=512):
    """x: (N, Tin, Cin) -> (N, Tout, Cout).  w: (Cout, Cin//groups, K), b: (Cout,)."""
    N, Tin, Cin = x.shape
    Cout, Cin_g, K = w.shape
    G = groups
    Cout_g = Cout // G
    assert Cin_g * G == Cin and Cout_g * G == Cout

    # Pack `gp` groups into the 128 output lanes (block-diagonal per-pack weights).
    gp = max(1, min(G, 128 // max(Cout_g, 1)))
    while G % gp:
        gp -= 1
    Gp = G // gp
    CL = gp * Cin_g
    Npk = gp * Cout_g
    if Gp == 1:
        CLp = _round_up(max(CL, 8), 8)
        Npk_p = _round_up(Npk, 128)
    else:
        CLp = CL
        Npk_p = Npk
        assert Npk_p % 128 == 0, "group packing must fill 128-lane packs"
    Ct = Gp * CLp
    Np = Gp * Npk_p
    SC = stride * Ct

    Tout = (Tin + 2 * padding - K) // stride + 1
    q_hi = (K - 1) // stride
    assert Tout >= 1
    assert q_hi <= _HALO

    # Tile rows from the per-generation VMEM budget (weights are VMEM-resident).
    w_bytes = Gp * K * CLp * Npk_p * 2
    budget, vmem_limit = _vmem_budgets()
    per_row = 6 * SC + 4 * Np + 8 * Npk_p + 64
    avail = budget - 2 * w_bytes - 6 * _HALO * SC
    cap_rows = max(16, avail // per_row)
    tm = min(max_rows, cap_rows, _round_up(Tout + q_hi, 16))
    tm = max(16, (tm // 16) * 16)

    Mp = _round_up(Tout + q_hi, tm)          # padded output rows per batch element
    R = N * Mp
    nm = R // tm

    # Input: zero-pad time & channels, fold stride phases into lanes (free reshape).
    pad_r = Mp * stride - padding - Tin
    assert pad_r >= 0
    xq = jnp.pad(x.astype(jnp.bfloat16),
                 ((0, 0), (padding, pad_r), (0, Ct - Cin)))
    xq = xq.reshape(R, SC)

    # Packed block-diagonal weights (Gp, K, CLp, Npk_p) and bias (1, Np).
    wr = w.astype(jnp.float32).reshape(Gp, gp, Cout_g, Cin_g, K)
    wr = wr.transpose(0, 4, 1, 3, 2)                 # (Gp, K, gp, Cin_g, Cout_g)
    eye = jnp.eye(gp, dtype=jnp.float32)
    wbd = wr[:, :, :, :, None, :] * eye[None, None, :, None, :, None]
    wbd = wbd.reshape(Gp, K, gp * Cin_g, gp * Cout_g)
    wbd = jnp.pad(wbd, ((0, 0), (0, 0), (0, CLp - CL), (0, Npk_p - Npk)))
    wbd = wbd.astype(jnp.bfloat16)
    bq = jnp.pad(b.astype(jnp.float32).reshape(Gp, Npk),
                 ((0, 0), (0, Npk_p - Npk))).reshape(1, Np)

    tm_in_hb = tm // _HALO
    last_hb_block = R // _HALO - 1

    kernel = functools.partial(
        _conv_tap_kernel, num_taps=K, stride=stride, num_packs=Gp,
        clp=CLp, npk=Npk_p, ct=Ct, apply_lrelu=bool(lrelu))

    out = pl.pallas_call(
        kernel,
        out_shape=jax.ShapeDtypeStruct((R, Np), out_dtype),
        grid_spec=pltpu.PrefetchScalarGridSpec(
            num_scalar_prefetch=0,
            grid=(nm,),
            in_specs=[
                pl.BlockSpec((tm, SC), lambda m: (m, 0)),
                pl.BlockSpec((_HALO, SC),
                             lambda m: (jnp.minimum((m + 1) * tm_in_hb,
                                                    last_hb_block), 0)),
                pl.BlockSpec((Gp, K, CLp, Npk_p), lambda m: (0, 0, 0, 0)),
                pl.BlockSpec((1, Np), lambda m: (0, 0)),
            ],
            out_specs=pl.BlockSpec((tm, Np), lambda m: (m, 0)),
            scratch_shapes=[pltpu.VMEM((tm + _HALO, SC), jnp.bfloat16)],
        ),
        compiler_params=pltpu.CompilerParams(
            dimension_semantics=("parallel",),
            vmem_limit_bytes=vmem_limit,
        ),
    )(xq, xq, wbd, bq)

    return out.reshape(N, Mp, Np)[:, :Tout, :Cout]


# -----------------------------------------------------------------------------
# Discriminators
# -----------------------------------------------------------------------------
DISC_S_CFG = [
    # (cin, cout, kernel, stride, padding, groups)
    (1, 16, 15, 1, 7, 1),
    (16, 64, 41, 4, 20, 4),
    (64, 256, 41, 4, 20, 16),
    (256, 1024, 41, 4, 20, 64),
    (1024, 1024, 41, 4, 20, 256),
    (1024, 1024, 5, 1, 2, 1),
]
DISC_P_CHANNELS = [(1, 32), (32, 128), (128, 512), (512, 1024), (1024, 1024)]
DISC_P_STRIDES = [3, 3, 3, 3, 1]
DISC_P_KSIZE = 5
DISC_P_PAD = (DISC_P_KSIZE - 1) // 2      # get_padding(5, 1) = 2
PERIODS = [2, 3, 5, 7, 11]


def discriminator_s_forward(params, x):
    """x: (N, 1, T).  Returns (logits (N, T'), fmaps in PyTorch (N, C, T) layout)."""
    fmap = []
    h = jnp.transpose(x, (0, 2, 1))                      # channels-last (N, T, 1)
    for (cin, cout, k, s, p, g), (w, b) in zip(DISC_S_CFG, params["convs"]):
        h = conv1d_cl(h, w, b, s, p, g, lrelu=True, out_dtype=jnp.bfloat16)
        fmap.append(jnp.transpose(h, (0, 2, 1)))
    wp, bp = params["conv_post"]
    h = conv1d_cl(h, wp, bp, 1, 1, 1, lrelu=False, out_dtype=jnp.float32)
    fmap.append(jnp.transpose(h, (0, 2, 1)))
    out = h.reshape(h.shape[0], -1)
    return out, fmap


def discriminator_p_forward(params, period, x):
    """x: (N, 1, T).  The (K,1) convs are pointwise along the period axis, so the
    period is folded into the batch and every layer is a channels-last conv1d."""
    fmap = []
    N, _, t = x.shape
    if t % period != 0:
        n_pad = period - t % period
        x = jnp.pad(x, ((0, 0), (0, 0), (0, n_pad)), mode="reflect")
        t = t + n_pad
    H = t // period
    h = x.reshape(N, H, period).transpose(0, 2, 1).reshape(N * period, H, 1)
    for i, (w, bias) in enumerate(params["convs"]):
        h = conv1d_cl(h, w[:, :, :, 0], bias, DISC_P_STRIDES[i], DISC_P_PAD, 1,
                      lrelu=True, out_dtype=jnp.bfloat16)
        Hi, Ci = h.shape[1], h.shape[2]
        fmap.append(h.reshape(N, period, Hi, Ci).transpose(0, 3, 2, 1))
    wp, bp = params["conv_post"]
    h = conv1d_cl(h, wp[:, :, :, 0], bp, 1, 1, 1,
                  lrelu=False, out_dtype=jnp.float32)
    Hp = h.shape[1]
    fmap.append(h.reshape(N, period, Hp, 1).transpose(0, 3, 2, 1))
    out = h.reshape(N, period, Hp).transpose(0, 2, 1).reshape(N, -1)
    return out, fmap


# -----------------------------------------------------------------------------
# Parameter initialization (deterministic, synthetic; weight_norm = identity)
# -----------------------------------------------------------------------------
def init_disc_s_params(key, scale=0.02):
    convs = []
    for (cin, cout, k, s, p, g) in DISC_S_CFG:
        key, k1, k2 = jax.random.split(key, 3)
        w = jax.random.normal(k1, (cout, cin // g, k), jnp.float32) * scale
        b = jax.random.normal(k2, (cout,), jnp.float32) * scale
        convs.append((w, b))
    key, k1, k2 = jax.random.split(key, 3)
    wp = jax.random.normal(k1, (1, 1024, 3), jnp.float32) * scale
    bp = jax.random.normal(k2, (1,), jnp.float32) * scale
    return {"convs": convs, "conv_post": (wp, bp)}


def init_disc_p_params(key, scale=0.02):
    convs = []
    for (cin, cout) in DISC_P_CHANNELS:
        key, k1, k2 = jax.random.split(key, 3)
        w = jax.random.normal(k1, (cout, cin, DISC_P_KSIZE, 1), jnp.float32) * scale
        b = jax.random.normal(k2, (cout,), jnp.float32) * scale
        convs.append((w, b))
    key, k1, k2 = jax.random.split(key, 3)
    wp = jax.random.normal(k1, (1, 1024, 3, 1), jnp.float32) * scale
    bp = jax.random.normal(k2, (1,), jnp.float32) * scale
    return {"convs": convs, "conv_post": (wp, bp)}


def init_mpd_params(key):
    keys = jax.random.split(key, 1 + len(PERIODS))
    params = [init_disc_s_params(keys[0])]
    params += [init_disc_p_params(k) for k in keys[1:]]
    return params


def _mpd_forward(params, y, y_hat):
    B = y.shape[0]
    ycat = jnp.concatenate([y, y_hat], axis=0)   # batch real & generated together
    y_d_rs, y_d_gs, fmap_rs, fmap_gs = [], [], [], []
    disc_list = [("s", None)] + [("p", p) for p in PERIODS]
    for prm, (kind, period) in zip(params, disc_list):
        if kind == "s":
            out, fmaps = discriminator_s_forward(prm, ycat)
        else:
            out, fmaps = discriminator_p_forward(prm, period, ycat)
        y_d_rs.append(out[:B])
        y_d_gs.append(out[B:])
        fmap_rs.append([f[:B] for f in fmaps])
        fmap_gs.append([f[B:] for f in fmaps])
    return y_d_rs, y_d_gs, fmap_rs, fmap_gs


mpd_forward = jax.jit(_mpd_forward)


# -----------------------------------------------------------------------------
# Pure-JAX reference conv (for the runtime numeric self-test)
# -----------------------------------------------------------------------------
def _conv1d_ref(x, w, b, stride, padding, groups, lrelu):
    N, T, Cin = x.shape
    Cout, Cin_g, K = w.shape
    G = groups
    xp = jnp.pad(x, ((0, 0), (padding, padding), (0, 0)))
    Tout = (T + 2 * padding - K) // stride + 1
    idx = jnp.arange(Tout)[:, None] * stride + jnp.arange(K)[None, :]
    patches = xp[:, idx, :].reshape(N, Tout, K, G, Cin_g)
    wr = w.reshape(G, Cout // G, Cin_g, K)
    out = jnp.einsum("ntkgc,gock->ntgo", patches, wr).reshape(N, Tout, Cout)
    out = out + b[None, None, :]
    if lrelu:
        out = jnp.where(out >= 0, out, LRELU_SLOPE * out)
    return out


def _check_conv(key, N, T, Cin, Cout, K, stride, padding, groups, max_rows):
    k1, k2, k3 = jax.random.split(key, 3)
    x = jax.random.normal(k1, (N, T, Cin), jnp.float32)
    w = jax.random.normal(k2, (Cout, Cin // groups, K), jnp.float32) * 0.05
    b = jax.random.normal(k3, (Cout,), jnp.float32) * 0.05
    got = conv1d_cl(x, w, b, stride, padding, groups, lrelu=True,
                    out_dtype=jnp.float32, max_rows=max_rows)
    ref = _conv1d_ref(x, w, b, stride, padding, groups, lrelu=True)
    err = jnp.max(jnp.abs(got - ref)) / (jnp.max(jnp.abs(ref)) + 1e-6)
    assert float(err) < 5e-2, f"conv1d_cl mismatch: rel_err={float(err)}"


# -----------------------------------------------------------------------------
if __name__ == "__main__":
    key = jax.random.PRNGKey(0)
    kp, ky, kg, kc1, kc2 = jax.random.split(key, 5)

    # Numeric self-tests of the tap-accumulating kernel (small tiles force the
    # multi-tile halo path to be exercised on real data).
    _check_conv(kc1, N=2, T=150, Cin=1, Cout=16, K=15, stride=1, padding=7,
                groups=1, max_rows=32)                       # DS layer-0 shape
    _check_conv(kc2, N=2, T=200, Cin=64, Cout=256, K=41, stride=4, padding=20,
                groups=16, max_rows=32)                      # grouped DS layer shape

    params = init_mpd_params(kp)

    B, C, T = 2, 1, 64
    y = jax.random.normal(ky, (B, C, T), jnp.float32)
    y_hat = jax.random.normal(kg, (B, C, T), jnp.float32)

    out = mpd_forward(params, y, y_hat)
    jax.block_until_ready(out)

    # structural sanity: DiscriminatorS -> 7 fmaps, each DiscriminatorP -> 6
    y_d_rs, y_d_gs, fmap_rs, fmap_gs = out
    assert len(y_d_rs) == 6 and len(y_d_gs) == 6
    assert len(fmap_rs[0]) == 7 and len(fmap_gs[0]) == 7
    assert all(len(f) == 6 for f in fmap_rs[1:])
    assert all(len(f) == 6 for f in fmap_gs[1:])
    assert all(o.shape[0] == B for o in y_d_rs)
    assert all(o.shape[0] == B for o in y_d_gs)

    print("KERNEL_OK")
</pallas_src>

<mosaic_0001>
module attributes {stable_mosaic.version = 11 : i64} {
  func.func @_conv_tap_kernel(%arg0: i32, %arg1: memref<32x8xbf16, #tpu.memory_space<vmem>>, %arg2: memref<16x8xbf16, #tpu.memory_space<vmem>>, %arg3: memref<1x15x8x128xbf16, #tpu.memory_space<vmem>>, %arg4: memref<1x128xf32, #tpu.memory_space<vmem>>, %arg5: memref<32x128xf32, #tpu.memory_space<vmem>>, %arg6: memref<48x8xbf16, #tpu.memory_space<vmem>>) attributes {dimension_semantics = [#tpu.dimension_semantics<parallel>], iteration_bounds = array<i64: 12>, scalar_prefetch = 0 : i64, scratch_operands = 1 : i64, tpu.core_type = #tpu.core_type<tc>, window_params = [{transform_indices = @transform_0, window_bounds = array<i64: 32, 8>}, {transform_indices = @transform_1, window_bounds = array<i64: 16, 8>}, {pipeline_mode = #tpu.pipeline_mode<synchronous>, transform_indices = @transform_2, window_bounds = array<i64: 1, 15, 8, 128>}, {pipeline_mode = #tpu.pipeline_mode<synchronous>, transform_indices = @transform_3, window_bounds = array<i64: 1, 128>}, {transform_indices = @transform_4, window_bounds = array<i64: 32, 128>}]} {
    %c0 = arith.constant 0 : index
    %c0_0 = arith.constant 0 : index
    %0 = vector.load %arg1[%c0, %c0_0] : memref<32x8xbf16, #tpu.memory_space<vmem>>, vector<32x8xbf16>
    %c0_1 = arith.constant 0 : index
    %c0_2 = arith.constant 0 : index
    %1 = vector.load %arg6[%c0_1, %c0_2] : memref<48x8xbf16, #tpu.memory_space<vmem>>, vector<32x8xbf16>
    tpu.vector_store %arg6[%c0_1, %c0_2], %0 {strides = array<i32>} : memref<48x8xbf16, #tpu.memory_space<vmem>>, vector<32x8xbf16>,
    %c0_3 = arith.constant 0 : index
    %c0_4 = arith.constant 0 : index
    %2 = vector.load %arg2[%c0_3, %c0_4] : memref<16x8xbf16, #tpu.memory_space<vmem>>, vector<16x8xbf16>
    %c32 = arith.constant 32 : index
    %c0_5 = arith.constant 0 : index
    %3 = vector.load %arg6[%c32, %c0_5] : memref<48x8xbf16, #tpu.memory_space<vmem>>, vector<16x8xbf16>
    tpu.vector_store %arg6[%c32, %c0_5], %2 {strides = array<i32>} : memref<48x8xbf16, #tpu.memory_space<vmem>>, vector<16x8xbf16>,
    %cst = arith.constant 0.000000e+00 : f32
    %4 = vector.broadcast %cst : f32 to vector<32x128xf32>
    %c0_6 = arith.constant 0 : index
    %c0_7 = arith.constant 0 : index
    %5 = vector.load %arg6[%c0_6, %c0_7] : memref<48x8xbf16, #tpu.memory_space<vmem>>, vector<32x8xbf16>
    %c0_8 = arith.constant 0 : index
    %c0_9 = arith.constant 0 : index
    %c0_10 = arith.constant 0 : index
    %c0_11 = arith.constant 0 : index
    %6 = vector.load %arg3[%c0_8, %c0_9, %c0_10, %c0_11] : memref<1x15x8x128xbf16, #tpu.memory_space<vmem>>, vector<1x1x8x128xbf16>
    %7 = vector.shape_cast %6 : vector<1x1x8x128xbf16> to vector<8x128xbf16>
    %cst_12 = arith.constant dense<0.000000e+00> : vector<32x128xf32>
    %8 = tpu.matmul %5, %7, %cst_12 {dimension_numbers = #tpu.dot_dimension_numbers<[1], [0], [0], [1], [0, 0, 1, 1], [], []>} : vector<32x8xbf16>, vector<8x128xbf16>, vector<32x128xf32> -> vector<32x128xf32>
    %9 = arith.addf %4, %8 : vector<32x128xf32>
    %c1 = arith.constant 1 : index
    %c0_13 = arith.constant 0 : index
    %10 = vector.load %arg6[%c1, %c0_13] : memref<48x8xbf16, #tpu.memory_space<vmem>>, vector<32x8xbf16>
    %c0_14 = arith.constant 0 : index
    %c1_15 = arith.constant 1 : index
    %c0_16 = arith.constant 0 : index
    %c0_17 = arith.constant 0 : index
    %11 = vector.load %arg3[%c0_14, %c1_15, %c0_16, %c0_17] : memref<1x15x8x128xbf16, #tpu.memory_space<vmem>>, vector<1x1x8x128xbf16>
    %12 = vector.shape_cast %11 : vector<1x1x8x128xbf16> to vector<8x128xbf16>
    %cst_18 = arith.constant dense<0.000000e+00> : vector<32x128xf32>
    %13 = tpu.matmul %10, %12, %cst_18 {dimension_numbers = #tpu.dot_dimension_numbers<[1], [0], [0], [1], [0, 0, 1, 1], [], []>} : vector<32x8xbf16>, vector<8x128xbf16>, vector<32x128xf32> -> vector<32x128xf32>
    %14 = arith.addf %9, %13 : vector<32x128xf32>
    %c2 = arith.constant 2 : index
    %c0_19 = arith.constant 0 : index
    %15 = vector.load %arg6[%c2, %c0_19] : memref<48x8xbf16, #tpu.memory_space<vmem>>, vector<32x8xbf16>
    %c0_20 = arith.constant 0 : index
    %c2_21 = arith.constant 2 : index
    %c0_22 = arith.constant 0 : index
    %c0_23 = arith.constant 0 : index
    %16 = vector.load %arg3[%c0_20, %c2_21, %c0_22, %c0_23] : memref<1x15x8x128xbf16, #tpu.memory_space<vmem>>, vector<1x1x8x128xbf16>
    %17 = vector.shape_cast %16 : vector<1x1x8x128xbf16> to vector<8x128xbf16>
    %cst_24 = arith.constant dense<0.000000e+00> : vector<32x128xf32>
    %18 = tpu.matmul %15, %17, %cst_24 {dimension_numbers = #tpu.dot_dimension_numbers<[1], [0], [0], [1], [0, 0, 1, 1], [], []>} : vector<32x8xbf16>, vector<8x128xbf16>, vector<32x128xf32> -> vector<32x128xf32>
    %19 = arith.addf %14, %18 : vector<32x128xf32>
    %c3 = arith.constant 3 : index
    %c0_25 = arith.constant 0 : index
    %20 = vector.load %arg6[%c3, %c0_25] : memref<48x8xbf16, #tpu.memory_space<vmem>>, vector<32x8xbf16>
    %c0_26 = arith.constant 0 : index
    %c3_27 = arith.constant 3 : index
    %c0_28 = arith.constant 0 : index
    %c0_29 = arith.constant 0 : index
    %21 = vector.load %arg3[%c0_26, %c3_27, %c0_28, %c0_29] : memref<1x15x8x128xbf16, #tpu.memory_space<vmem>>, vector<1x1x8x128xbf16>
    %22 = vector.shape_cast %21 : vector<1x1x8x128xbf16> to vector<8x128xbf16>
    %cst_30 = arith.constant dense<0.000000e+00> : vector<32x128xf32>
    %23 = tpu.matmul %20, %22, %cst_30 {dimension_numbers = #tpu.dot_dimension_numbers<[1], [0], [0], [1], [0, 0, 1, 1], [], []>} : vector<32x8xbf16>, vector<8x128xbf16>, vector<32x128xf32> -> vector<32x128xf32>
    %24 = arith.addf %19, %23 : vector<32x128xf32>
    %c4 = arith.constant 4 : index
    %c0_31 = arith.constant 0 : index
    %25 = vector.load %arg6[%c4, %c0_31] : memref<48x8xbf16, #tpu.memory_space<vmem>>, vector<32x8xbf16>
    %c0_32 = arith.constant 0 : index
    %c4_33 = arith.constant 4 : index
    %c0_34 = arith.constant 0 : index
    %c0_35 = arith.constant 0 : index
    %26 = vector.load %arg3[%c0_32, %c4_33, %c0_34, %c0_35] : memref<1x15x8x128xbf16, #tpu.memory_space<vmem>>, vector<1x1x8x128xbf16>
    %27 = vector.shape_cast %26 : vector<1x1x8x128xbf16> to vector<8x128xbf16>
    %cst_36 = arith.constant dense<0.000000e+00> : vector<32x128xf32>
    %28 = tpu.matmul %25, %27, %cst_36 {dimension_numbers = #tpu.dot_dimension_numbers<[1], [0], [0], [1], [0, 0, 1, 1], [], []>} : vector<32x8xbf16>, vector<8x128xbf16>, vector<32x128xf32> -> vector<32x128xf32>
    %29 = arith.addf %24, %28 : vector<32x128xf32>
    %c5 = arith.constant 5 : index
    %c0_37 = arith.constant 0 : index
    %30 = vector.load %arg6[%c5, %c0_37] : memref<48x8xbf16, #tpu.memory_space<vmem>>, vector<32x8xbf16>
    %c0_38 = arith.constant 0 : index
    %c5_39 = arith.constant 5 : index
    %c0_40 = arith.constant 0 : index
    %c0_41 = arith.constant 0 : index
    %31 = vector.load %arg3[%c0_38, %c5_39, %c0_40, %c0_41] : memref<1x15x8x128xbf16, #tpu.memory_space<vmem>>, vector<1x1x8x128xbf16>
    %32 = vector.shape_cast %31 : vector<1x1x8x128xbf16> to vector<8x128xbf16>
    %cst_42 = arith.constant dense<0.000000e+00> : vector<32x128xf32>
    %33 = tpu.matmul %30, %32, %cst_42 {dimension_numbers = #tpu.dot_dimension_numbers<[1], [0], [0], [1], [0, 0, 1, 1], [], []>} : vector<32x8xbf16>, vector<8x128xbf16>, vector<32x128xf32> -> vector<32x128xf32>
    %34 = arith.addf %29, %33 : vector<32x128xf32>
    %c6 = arith.constant 6 : index
    %c0_43 = arith.constant 0 : index
    %35 = vector.load %arg6[%c6, %c0_43] : memref<48x8xbf16, #tpu.memory_space<vmem>>, vector<32x8xbf16>
    %c0_44 = arith.constant 0 : index
    %c6_45 = arith.constant 6 : index
    %c0_46 = arith.constant 0 : index
    %c0_47 = arith.constant 0 : index
    %36 = vector.load %arg3[%c0_44, %c6_45, %c0_46, %c0_47] : memref<1x15x8x128xbf16, #tpu.memory_space<vmem>>, vector<1x1x8x128xbf16>
    %37 = vector.shape_cast %36 : vector<1x1x8x128xbf16> to vector<8x128xbf16>
    %cst_48 = arith.constant dense<0.000000e+00> : vector<32x128xf32>
    %38 = tpu.matmul %35, %37, %cst_48 {dimension_numbers = #tpu.dot_dimension_numbers<[1], [0], [0], [1], [0, 0, 1, 1], [], []>} : vector<32x8xbf16>, vector<8x128xbf16>, vector<32x128xf32> -> vector<32x128xf32>
    %39 = arith.addf %34, %38 : vector<32x128xf32>
    %c7 = arith.constant 7 : index
    %c0_49 = arith.constant 0 : index
    %40 = vector.load %arg6[%c7, %c0_49] : memref<48x8xbf16, #tpu.memory_space<vmem>>, vector<32x8xbf16>
    %c0_50 = arith.constant 0 : index
    %c7_51 = arith.constant 7 : index
    %c0_52 = arith.constant 0 : index
    %c0_53 = arith.constant 0 : index
    %41 = vector.load %arg3[%c0_50, %c7_51, %c0_52, %c0_53] : memref<1x15x8x128xbf16, #tpu.memory_space<vmem>>, vector<1x1x8x128xbf16>
    %42 = vector.shape_cast %41 : vector<1x1x8x128xbf16> to vector<8x128xbf16>
    %cst_54 = arith.constant dense<0.000000e+00> : vector<32x128xf32>
    %43 = tpu.matmul %40, %42, %cst_54 {dimension_numbers = #tpu.dot_dimension_numbers<[1], [0], [0], [1], [0, 0, 1, 1], [], []>} : vector<32x8xbf16>, vector<8x128xbf16>, vector<32x128xf32> -> vector<32x128xf32>
    %44 = arith.addf %39, %43 : vector<32x128xf32>
    %c8 = arith.constant 8 : index
    %c0_55 = arith.constant 0 : index
    %45 = vector.load %arg6[%c8, %c0_55] : memref<48x8xbf16, #tpu.memory_space<vmem>>, vector<32x8xbf16>
    %c0_56 = arith.constant 0 : index
    %c8_57 = arith.constant 8 : index
    %c0_58 = arith.constant 0 : index
    %c0_59 = arith.constant 0 : index
    %46 = vector.load %arg3[%c0_56, %c8_57, %c0_58, %c0_59] : memref<1x15x8x128xbf16, #tpu.memory_space<vmem>>, vector<1x1x8x128xbf16>
    %47 = vector.shape_cast %46 : vector<1x1x8x128xbf16> to vector<8x128xbf16>
    %cst_60 = arith.constant dense<0.000000e+00> : vector<32x128xf32>
    %48 = tpu.matmul %45, %47, %cst_60 {dimension_numbers = #tpu.dot_dimension_numbers<[1], [0], [0], [1], [0, 0, 1, 1], [], []>} : vector<32x8xbf16>, vector<8x128xbf16>, vector<32x128xf32> -> vector<32x128xf32>
    %49 = arith.addf %44, %48 : vector<32x128xf32>
    %c9 = arith.constant 9 : index
    %c0_61 = arith.constant 0 : index
    %50 = vector.load %arg6[%c9, %c0_61] : memref<48x8xbf16, #tpu.memory_space<vmem>>, vector<32x8xbf16>
    %c0_62 = arith.constant 0 : index
    %c9_63 = arith.constant 9 : index
    %c0_64 = arith.constant 0 : index
    %c0_65 = arith.constant 0 : index
    %51 = vector.load %arg3[%c0_62, %c9_63, %c0_64, %c0_65] : memref<1x15x8x128xbf16, #tpu.memory_space<vmem>>, vector<1x1x8x128xbf16>
    %52 = vector.shape_cast %51 : vector<1x1x8x128xbf16> to vector<8x128xbf16>
    %cst_66 = arith.constant dense<0.000000e+00> : vector<32x128xf32>
    %53 = tpu.matmul %50, %52, %cst_66 {dimension_numbers = #tpu.dot_dimension_numbers<[1], [0], [0], [1], [0, 0, 1, 1], [], []>} : vector<32x8xbf16>, vector<8x128xbf16>, vector<32x128xf32> -> vector<32x128xf32>
    %54 = arith.addf %49, %53 : vector<32x128xf32>
    %c10 = arith.constant 10 : index
    %c0_67 = arith.constant 0 : index
    %55 = vector.load %arg6[%c10, %c0_67] : memref<48x8xbf16, #tpu.memory_space<vmem>>, vector<32x8xbf16>
    %c0_68 = arith.constant 0 : index
    %c10_69 = arith.constant 10 : index
    %c0_70 = arith.constant 0 : index
    %c0_71 = arith.constant 0 : index
    %56 = vector.load %arg3[%c0_68, %c10_69, %c0_70, %c0_71] : memref<1x15x8x128xbf16, #tpu.memory_space<vmem>>, vector<1x1x8x128xbf16>
    %57 = vector.shape_cast %56 : vector<1x1x8x128xbf16> to vector<8x128xbf16>
    %cst_72 = arith.constant dense<0.000000e+00> : vector<32x128xf32>
    %58 = tpu.matmul %55, %57, %cst_72 {dimension_numbers = #tpu.dot_dimension_numbers<[1], [0], [0], [1], [0, 0, 1, 1], [], []>} : vector<32x8xbf16>, vector<8x128xbf16>, vector<32x128xf32> -> vector<32x128xf32>
    %59 = arith.addf %54, %58 : vector<32x128xf32>
    %c11 = arith.constant 11 : index
    %c0_73 = arith.constant 0 : index
    %60 = vector.load %arg6[%c11, %c0_73] : memref<48x8xbf16, #tpu.memory_space<vmem>>, vector<32x8xbf16>
    %c0_74 = arith.constant 0 : index
    %c11_75 = arith.constant 11 : index
    %c0_76 = arith.constant 0 : index
    %c0_77 = arith.constant 0 : index
    %61 = vector.load %arg3[%c0_74, %c11_75, %c0_76, %c0_77] : memref<1x15x8x128xbf16, #tpu.memory_space<vmem>>, vector<1x1x8x128xbf16>
    %62 = vector.shape_cast %61 : vector<1x1x8x128xbf16> to vector<8x128xbf16>
    %cst_78 = arith.constant dense<0.000000e+00> : vector<32x128xf32>
    %63 = tpu.matmul %60, %62, %cst_78 {dimension_numbers = #tpu.dot_dimension_numbers<[1], [0], [0], [1], [0, 0, 1, 1], [], []>} : vector<32x8xbf16>, vector<8x128xbf16>, vector<32x128xf32> -> vector<32x128xf32>
    %64 = arith.addf %59, %63 : vector<32x128xf32>
    %c12 = arith.constant 12 : index
    %c0_79 = arith.constant 0 : index
    %65 = vector.load %arg6[%c12, %c0_79] : memref<48x8xbf16, #tpu.memory_space<vmem>>, vector<32x8xbf16>
    %c0_80 = arith.constant 0 : index
    %c12_81 = arith.constant 12 : index
    %c0_82 = arith.constant 0 : index
    %c0_83 = arith.constant 0 : index
    %66 = vector.load %arg3[%c0_80, %c12_81, %c0_82, %c0_83] : memref<1x15x8x128xbf16, #tpu.memory_space<vmem>>, vector<1x1x8x128xbf16>
    %67 = vector.shape_cast %66 : vector<1x1x8x128xbf16> to vector<8x128xbf16>
    %cst_84 = arith.constant dense<0.000000e+00> : vector<32x128xf32>
    %68 = tpu.matmul %65, %67, %cst_84 {dimension_numbers = #tpu.dot_dimension_numbers<[1], [0], [0], [1], [0, 0, 1, 1], [], []>} : vector<32x8xbf16>, vector<8x128xbf16>, vector<32x128xf32> -> vector<32x128xf32>
    %69 = arith.addf %64, %68 : vector<32x128xf32>
    %c13 = arith.constant 13 : index
    %c0_85 = arith.constant 0 : index
    %70 = vector.load %arg6[%c13, %c0_85] : memref<48x8xbf16, #tpu.memory_space<vmem>>, vector<32x8xbf16>
    %c0_86 = arith.constant 0 : index
    %c13_87 = arith.constant 13 : index
    %c0_88 = arith.constant 0 : index
    %c0_89 = arith.constant 0 : index
    %71 = vector.load %arg3[%c0_86, %c13_87, %c0_88, %c0_89] : memref<1x15x8x128xbf16, #tpu.memory_space<vmem>>, vector<1x1x8x128xbf16>
    %72 = vector.shape_cast %71 : vector<1x1x8x128xbf16> to vector<8x128xbf16>
    %cst_90 = arith.constant dense<0.000000e+00> : vector<32x128xf32>
    %73 = tpu.matmul %70, %72, %cst_90 {dimension_numbers = #tpu.dot_dimension_numbers<[1], [0], [0], [1], [0, 0, 1, 1], [], []>} : vector<32x8xbf16>, vector<8x128xbf16>, vector<32x128xf32> -> vector<32x128xf32>
    %74 = arith.addf %69, %73 : vector<32x128xf32>
    %c14 = arith.constant 14 : index
    %c0_91 = arith.constant 0 : index
    %75 = vector.load %arg6[%c14, %c0_91] : memref<48x8xbf16, #tpu.memory_space<vmem>>, vector<32x8xbf16>
    %c0_92 = arith.constant 0 : index
    %c14_93 = arith.constant 14 : index
    %c0_94 = arith.constant 0 : index
    %c0_95 = arith.constant 0 : index
    %76 = vector.load %arg3[%c0_92, %c14_93, %c0_94, %c0_95] : memref<1x15x8x128xbf16, #tpu.memory_space<vmem>>, vector<1x1x8x128xbf16>
    %77 = vector.shape_cast %76 : vector<1x1x8x128xbf16> to vector<8x128xbf16>
    %cst_96 = arith.constant dense<0.000000e+00> : vector<32x128xf32>
    %78 = tpu.matmul %75, %77, %cst_96 {dimension_numbers = #tpu.dot_dimension_numbers<[1], [0], [0], [1], [0, 0, 1, 1], [], []>} : vector<32x8xbf16>, vector<8x128xbf16>, vector<32x128xf32> -> vector<32x128xf32>
    %79 = arith.addf %74, %78 : vector<32x128xf32>
    %c0_97 = arith.constant 0 : index
    %c0_98 = arith.constant 0 : index
    %80 = vector.load %arg4[%c0_97, %c0_98] : memref<1x128xf32, #tpu.memory_space<vmem>>, vector<1x128xf32>
    %81 = vector.broadcast %80 : vector<1x128xf32> to vector<32x128xf32>
    %82 = arith.addf %79, %81 : vector<32x128xf32>
    %cst_99 = arith.constant 1.000000e-01 : f32
    %83 = vector.broadcast %cst_99 : f32 to vector<32x128xf32>
    %84 = arith.mulf %83, %82 : vector<32x128xf32>
    %85 = arith.maximumf %82, %84 : vector<32x128xf32>
    %c0_100 = arith.constant 0 : index
    %c0_101 = arith.constant 0 : index
    %86 = vector.load %arg5[%c0_100, %c0_101] : memref<32x128xf32, #tpu.memory_space<vmem>>, vector<32x128xf32>
    tpu.vector_store %arg5[%c0_100, %c0_101], %85 {strides = array<i32>} : memref<32x128xf32, #tpu.memory_space<vmem>>, vector<32x128xf32>,
    return
  }
  func.func @transform_0(%arg0: i32) -> (i32, i32) {
    %c0_i32 = arith.constant 0 : i32
    %c0_i32_0 = arith.constant 0 : i32
    return %arg0, %c0_i32 : i32, i32
  }
  func.func @transform_1(%arg0: i32) -> (i32, i32) {
    %c1_i32 = arith.constant 1 : i32
    %0 = arith.addi %arg0, %c1_i32 : i32
    %c2_i32 = arith.constant 2 : i32
    %1 = arith.muli %0, %c2_i32 : i32
    %c23_i32 = arith.constant 23 : i32
    %2 = arith.minsi %1, %c23_i32 : i32
    %c0_i32 = arith.constant 0 : i32
    %c0_i32_0 = arith.constant 0 : i32
    return %2, %c0_i32 : i32, i32
  }
  func.func @transform_2(%arg0: i32) -> (i32, i32, i32, i32) {
    %c0_i32 = arith.constant 0 : i32
    %c0_i32_0 = arith.constant 0 : i32
    %c0_i32_1 = arith.constant 0 : i32
    %c0_i32_2 = arith.constant 0 : i32
    %c0_i32_3 = arith.constant 0 : i32
    return %c0_i32, %c0_i32_0, %c0_i32_1, %c0_i32_2 : i32, i32, i32, i32
  }
  func.func @transform_3(%arg0: i32) -> (i32, i32) {
    %c0_i32 = arith.constant 0 : i32
    %c0_i32_0 = arith.constant 0 : i32
    %c0_i32_1 = arith.constant 0 : i32
    return %c0_i32, %c0_i32_0 : i32, i32
  }
  func.func @transform_4(%arg0: i32) -> (i32, i32) {
    %c0_i32 = arith.constant 0 : i32
    %c0_i32_0 = arith.constant 0 : i32
    return %arg0, %c0_i32 : i32, i32
  }
}

</mosaic_0001>

<llo_original>
// kernel: tpu_custom_call.1
$region0: #{tpu_custom_call.1}
  #allocation0 [shape = 'u32[]', space=smem, size = 0x4, offset = 0x4, fixed_abs, tag = 'smem constant byte address 0x4 - core index']
  #allocation1 [shape = 'u32[144,128]{1,0:T(1,128)}', space=vmem, size = 0x12000, scoped, tag = 'internal scratch']
  #allocation2 [shape = 'bf16[48,8]{1,0:T(8,128)(2,1)}', space=vmem, size = 0x3000, scoped, tag = 'scratch operand']
  %s0 = inlined_call_operand.vmem [shape: bf16[384,8], index: 0, kind: input, shape index: {}]
  %s1 = inlined_call_operand.vmem [shape: bf16[384,8], index: 1, kind: input, shape index: {}]
  %s2 = inlined_call_operand.vmem [shape: bf16[1,15,8,128], index: 2, kind: input, shape index: {}]
  %s3 = inlined_call_operand.vmem [shape: f32[1,128], index: 3, kind: input, shape index: {}]
  %s4 = inlined_call_operand.hbm [shape: f32[384,128], index: 4, kind: output, shape index: {}]
  %s5 = sld [smem:[#allocation0]]
  $region49: #{tpu_custom_call.1} parent=0
    _
  %s7 = ssub.s32 1, %s5
  %s8 = scalar_select 0, %s7, %s5
  $region1: #{tpu_custom_call.1} parent=0
    #allocation3 [shape = 'u8[32768]{0}', space=vmem, size = 0x8000, scoped, tag = 'output window, operand 0']
    #allocation4 [shape = 's32[2]{0}', space=sflag, size = 0x8, scoped, tag = 'scoped memory for tpu_custom_call.1']
    %9 = vsyncpa [#allocation4], 0
    %s10 = scalar_lea.sflag [#allocation4], 1
    %11 = vsyncpa %s10, 0
    loop: start=0, step=1, limit=14
    $region2: #{tpu_custom_call.1} parent=1 // loop_pre_header
      _
    $region3: #{tpu_custom_call.1} parent=1 // loop_header
      %s13 = sphi 0, %s17
      %p14 = scmp.ge.s32.totalorder %s13, 14
      %s23 = sphi 0, %s25
      %s26 = sphi 0, %s23
      %s27 = sphi 0, %s26
      %s43 = sphi 0, %s27
      %s57 = sphi 0, %s59
      %s60 = sphi 0, %s57
      %s61 = sphi 0, %s60
      %s77 = sphi 0, %s61
      %s81 = sphi 0, %s81
      %s83 = sphi 0, %s81
      %s84 = sphi 0, %s83
      %s98 = sphi 0, %s84
      %s102 = sphi 0, %s102
      %s104 = sphi 0, %s102
      %s105 = sphi 0, %s104
      %s119 = sphi 0, %s105
      %s125 = sphi 0, %s127
      %s128 = sphi 0, %s125
      %s129 = sphi 0, %s128
      %s145 = sphi 0, %s129
    $region4: #{tpu_custom_call.1} parent=1 // loop_header_branch
      %16 = sbr.rel (%p14) target = $region8
    $region5: #{tpu_custom_call.1} parent=1 // loop_body
      %s18 = ssub.s32 %s13, 1
      %s19 = ssub.s32 %s13, 2
      %s20 = sadd.s32 %s13, 1
      %s21 = ssub.s32 %s13, %s20
      %p22 = scmp.eq.s32.totalorder %s21, 0
      %s24 = sadd.s32 %s23, 1
      %s25 = scalar_select %p22, %s23, %s24
      %p28 = pneg %p22
      %p29 = scmp.eq.s32.totalorder %s13, 11
      %p30 = por %p28, %p29
      %p31 = scmp.ne.s32.totalorder %s23, %s26
      %p32 = scmp.eq.s32.totalorder %s13, 0
      %p33 = por %p31, %p32
      %p34 = scmp.ne.s32.totalorder %s23, %s26
      %p35 = scmp.eq.s32.totalorder %s18, 11
      %p36 = por %p34, %p35
      %p37 = scmp.ne.s32.totalorder %s26, %s27
      %p38 = scmp.eq.s32.totalorder %s18, 0
      %p39 = por %p37, %p38
      %p40 = scmp.ne.s32.totalorder %s26, %s27
      %p41 = scmp.eq.s32.totalorder %s19, 11
      %p42 = por %p40, %p41
      %p44 = scmp.ne.s32.totalorder %s27, %s43
      %p45 = scmp.eq.s32.totalorder %s19, 0
      %p46 = por %p44, %p45
      %s47 = sadd.s32 %s13, 1
      %s48 = smul.u32 %s47, 2
      %p49 = scmp.lt.s32.totalorder %s48, 23
      %s50 = scalar_select %p49, %s48, 23
      %s51 = sadd.s32 %s20, 1
      %s52 = smul.u32 %s51, 2
      %p53 = scmp.lt.s32.totalorder %s52, 23
      %s54 = scalar_select %p53, %s52, 23
      %s55 = ssub.s32 %s50, %s54
      %p56 = scmp.eq.s32.totalorder %s55, 0
      %s58 = sadd.s32 %s57, 1
      %s59 = scalar_select %p56, %s57, %s58
      %p62 = pneg %p56
      %p63 = scmp.eq.s32.totalorder %s13, 11
      %p64 = por %p62, %p63
      %p65 = scmp.ne.s32.totalorder %s57, %s60
      %p66 = scmp.eq.s32.totalorder %s13, 0
      %p67 = por %p65, %p66
      %p68 = scmp.ne.s32.totalorder %s57, %s60
      %p69 = scmp.eq.s32.totalorder %s18, 11
      %p70 = por %p68, %p69
      %p71 = scmp.ne.s32.totalorder %s60, %s61
      %p72 = scmp.eq.s32.totalorder %s18, 0
      %p73 = por %p71, %p72
      %p74 = scmp.ne.s32.totalorder %s60, %s61
      %p75 = scmp.eq.s32.totalorder %s19, 11
      %p76 = por %p74, %p75
      %p78 = scmp.ne.s32.totalorder %s61, %s77
      %p79 = scmp.eq.s32.totalorder %s19, 0
      %p80 = por %p78, %p79
      %s82 = sadd.s32 %s81, 1
      %p85 = scmp.eq.s32.totalorder %s13, 11
      %p86 = scmp.ne.s32.totalorder %s81, %s83
      %p87 = scmp.eq.s32.totalorder %s13, 0
      %p88 = por %p86, %p87
      %p89 = scmp.ne.s32.totalorder %s81, %s83
      %p90 = scmp.eq.s32.totalorder %s18, 11
      %p91 = por %p89, %p90
      %p92 = scmp.ne.s32.totalorder %s83, %s84
      %p93 = scmp.eq.s32.totalorder %s18, 0
      %p94 = por %p92, %p93
      %p95 = scmp.ne.s32.totalorder %s83, %s84
      %p96 = scmp.eq.s32.totalorder %s19, 11
      %p97 = por %p95, %p96
      %p99 = scmp.ne.s32.totalorder %s84, %s98
      %p100 = scmp.eq.s32.totalorder %s19, 0
      %p101 = por %p99, %p100
      %s103 = sadd.s32 %s102, 1
      %p106 = scmp.eq.s32.totalorder %s13, 11
      %p107 = scmp.ne.s32.totalorder %s102, %s104
      %p108 = scmp.eq.s32.totalorder %s13, 0
      %p109 = por %p107, %p108
      %p110 = scmp.ne.s32.totalorder %s102, %s104
      %p111 = scmp.eq.s32.totalorder %s18, 11
      %p112 = por %p110, %p111
      %p113 = scmp.ne.s32.totalorder %s104, %s105
      %p114 = scmp.eq.s32.totalorder %s18, 0
      %p115 = por %p113, %p114
      %p116 = scmp.ne.s32.totalorder %s104, %s105
      %p117 = scmp.eq.s32.totalorder %s19, 11
      %p118 = por %p116, %p117
      %p120 = scmp.ne.s32.totalorder %s105, %s119
      %p121 = scmp.eq.s32.totalorder %s19, 0
      %p122 = por %p120, %p121
      %s123 = ssub.s32 %s13, %s20
      %p124 = scmp.eq.s32.totalorder %s123, 0
      %s126 = sadd.s32 %s125, 1
      %s127 = scalar_select %p124, %s125, %s126
      %p130 = pneg %p124
      %p131 = scmp.eq.s32.totalorder %s13, 11
      %p132 = por %p130, %p131
      %p133 = scmp.ne.s32.totalorder %s125, %s128
      %p134 = scmp.eq.s32.totalorder %s13, 0
      %p135 = por %p133, %p134
      %p136 = scmp.ne.s32.totalorder %s125, %s128
      %p137 = scmp.eq.s32.totalorder %s18, 11
      %p138 = por %p136, %p137
      %p139 = scmp.ne.s32.totalorder %s128, %s129
      %p140 = scmp.eq.s32.totalorder %s18, 0
      %p141 = por %p139, %p140
      %p142 = scmp.ne.s32.totalorder %s128, %s129
      %p143 = scmp.eq.s32.totalorder %s19, 11
      %p144 = por %p142, %p143
      %p146 = scmp.ne.s32.totalorder %s129, %s145
      %p147 = scmp.eq.s32.totalorder %s19, 0
      %p148 = por %p146, %p147
      %p149 = scmp.le.s32.totalorder 1, %s13
      %p150 = scmp.lt.s32.totalorder %s13, 13
      %p151 = pnand %p149, %p150
      %p152 = pneg %p151
      // Predicated region
      $region9: #{tpu_custom_call.1} parent=5 // pred_check
        _
      $region10: #{tpu_custom_call.1} parent=5 // pred_check_branch
        %154 = sbr.rel (%p151) target = $region12
      $region11: #{tpu_custom_call.1} parent=5 // pred_region
        %s155 = ssub.s32 %s13, 1
        // Predicated region
        $region13: #{tpu_custom_call.1} parent=11 // pred_check
          %p156 = pneg %p94
        $region14: #{tpu_custom_call.1} parent=11 // pred_check_branch
          %158 = sbr.rel (%p156) target = $region16
        $region15: #{tpu_custom_call.1} parent=11 // pred_region
          _
        $region16: #{tpu_custom_call.1} parent=11 // pred_fallthru
          _
        // Predicated region
        $region17: #{tpu_custom_call.1} parent=11 // pred_check
          %p159 = pneg %p115
        $region18: #{tpu_custom_call.1} parent=11 // pred_check_branch
          %161 = sbr.rel (%p159) target = $region20
        $region19: #{tpu_custom_call.1} parent=11 // pred_region
          _
        $region20: #{tpu_custom_call.1} parent=11 // pred_fallthru
          _
      $region12: #{tpu_custom_call.1} parent=5 // pred_fallthru
        _
      %p162 = scmp.lt.s32.totalorder %s13, 12
      // Predicated region
      $region21: #{tpu_custom_call.1} parent=5 // pred_check
        %p163 = pneg %p162
      $region22: #{tpu_custom_call.1} parent=5 // pred_check_branch
        %165 = sbr.rel (%p163) target = $region24
      $region23: #{tpu_custom_call.1} parent=5 // pred_region
        // Predicated region
        $region25: #{tpu_custom_call.1} parent=23 // pred_check
          %p166 = pneg %p33
        $region26: #{tpu_custom_call.1} parent=23 // pred_check_branch
          %168 = sbr.rel (%p166) target = $region28
        $region27: #{tpu_custom_call.1} parent=23 // pred_region
          %s169 = smul.u32 4, %s13
          %p170 = scmp.lt.s32.totalorder %s169, 47
          %s171 = scalar_select %p170, %s169, 47
          %s172 = smul.addr %s171, 4
          %s173 = scalar_lea.vmem %s0, %s172
          %s174 = smul.u32 4, %s13
        $region28: #{tpu_custom_call.1} parent=23 // pred_fallthru
          _
        // Predicated region
        $region29: #{tpu_custom_call.1} parent=23 // pred_check
          %p175 = pneg %p67
        $region30: #{tpu_custom_call.1} parent=23 // pred_check_branch
          %177 = sbr.rel (%p175) target = $region32
        $region31: #{tpu_custom_call.1} parent=23 // pred_region
          %s178 = sadd.s32 %s13, 1
          %s179 = smul.u32 %s178, 2
          %p180 = scmp.lt.s32.totalorder %s179, 23
          %s181 = scalar_select %p180, %s179, 23
          %s182 = smul.u32 2, %s181
          %p183 = scmp.lt.s32.totalorder %s182, 47
          %s184 = scalar_select %p183, %s182, 47
          %s185 = smul.addr %s184, 4
          %s186 = scalar_lea.vmem %s1, %s185
          %s187 = sadd.s32 %s13, 1
          %s188 = smul.u32 %s187, 2
          %p189 = scmp.lt.s32.totalorder %s188, 23
          %s190 = scalar_select %p189, %s188, 23
          %s191 = smul.u32 2, %s190
        $region32: #{tpu_custom_call.1} parent=23 // pred_fallthru
          _
      $region24: #{tpu_custom_call.1} parent=5 // pred_fallthru
        _
      %p192 = scmp.le.s32.totalorder 1, %s13
      %p193 = scmp.lt.s32.totalorder %s13, 13
      %p194 = pnand %p192, %p193
      %p195 = pneg %p194
      // Predicated region
      $region33: #{tpu_custom_call.1} parent=5 // pred_check
        _
      $region34: #{tpu_custom_call.1} parent=5 // pred_check_branch
        %197 = sbr.rel (%p194) target = $region36
      $region35: #{tpu_custom_call.1} parent=5 // pred_region
        %s198 = ssub.s32 %s13, 1
        %s199 = smul.u32 4, %s18
        %p200 = scmp.lt.s32.totalorder %s199, 47
        %s201 = scalar_select %p200, %s199, 47
        %s202 = smul.addr %s201, 4
        %s203 = scalar_lea.vmem %s0, %s202
        %p204 = pneg %p39
        %p205 = pneg %p36
        %s206 = sadd.s32 %s18, 1
        %s207 = smul.u32 %s206, 2
        %p208 = scmp.lt.s32.totalorder %s207, 23
        %s209 = scalar_select %p208, %s207, 23
        %s210 = smul.u32 2, %s209
        %p211 = scmp.lt.s32.totalorder %s210, 47
        %s212 = scalar_select %p211, %s210, 47
        %s213 = smul.addr %s212, 4
        %s214 = scalar_lea.vmem %s1, %s213
        %p215 = pneg %p73
        %p216 = pneg %p70
        %p217 = pneg %p94
        %p218 = pneg %p91
        %p219 = pneg %p115
        %p220 = pneg %p112
        %p221 = pneg %p141
        %p222 = pneg %p138
        %s223 = sand.u32 %s128, 1
        %s224 = scalar_lea.sflag [#allocation4], %s223
        %s225 = sand.u32 %s128, 1
        %s226 = smul.addr %s225, 32
        %s227 = scalar_lea.vmem [#allocation3], %s226
        %s228 = smul.u32 4, %s18
        %p229 = scmp.lt.s32.totalorder %s228, 47
        %s230 = scalar_select %p229, %s228, 47
        %s231 = smul.addr %s230, 4
        %s232 = scalar_lea.vmem %s0, %s231
        %s233 = smul.u32 4, %s18
        %s234 = sadd.s32 %s18, 1
        %s235 = smul.u32 %s234, 2
        %p236 = scmp.lt.s32.totalorder %s235, 23
        %s237 = scalar_select %p236, %s235, 23
        %s238 = smul.u32 2, %s237
        %p239 = scmp.lt.s32.totalorder %s238, 47
        %s240 = scalar_select %p239, %s238, 47
        %s241 = smul.addr %s240, 4
        %s242 = scalar_lea.vmem %s1, %s241
        %s243 = sadd.s32 %s18, 1
        %s244 = smul.u32 %s243, 2
        %p245 = scmp.lt.s32.totalorder %s244, 23
        %s246 = scalar_select %p245, %s244, 23
        %s247 = smul.u32 2, %s246
        %s248 = smul.u32 4, %s18
        %v250 = vld [vmem:[%s232] sm:$0xf]
        %v251 = vld [vmem:[%s232 + $0x4] sm:$0xf]
        %v252 = vld [vmem:[%s232 + $0x8] sm:$0xf]
        %v253 = vld [vmem:[%s232 + $0xc] sm:$0xf]
        %vm254 = vcmask 60416
        %255 = vst.msk [vmem:[#allocation2] sm:$0xf] %vm254, %v250
        %256 = vst.msk [vmem:[#allocation2 + $0x4] sm:$0xf] %vm254, %v251
        %257 = vst.msk [vmem:[#allocation2 + $0x8] sm:$0xf] %vm254, %v252
        %258 = vst.msk [vmem:[#allocation2 + $0xc] sm:$0xf] %vm254, %v253
        %v259 = vld [vmem:[%s242] sm:$0xf]
        %v260 = vld [vmem:[%s242 + $0x4] sm:$0xf]
        %261 = vst.msk [vmem:[#allocation2 + $0x10] sm:$0xf] %vm254, %v259
        %262 = vst.msk [vmem:[#allocation2 + $0x14] sm:$0xf] %vm254, %v260
        %v263 = vld [vmem:[#allocation2] sm:$0xf]
        %v264 = vld [vmem:[#allocation2 + $0x4] sm:$0xf]
        %v265 = vld [vmem:[#allocation2 + $0x8] sm:$0xf]
        %v266 = vld [vmem:[#allocation2 + $0xc] sm:$0xf]
        %v267 = vld [vmem:[%s2] sm:$0xf]
        %v268 = vld [vmem:[#allocation2 + $0x10] sm:$0x1]
        %s269 = scalar_lea.vmem %s2, 4
        %v270 = vld [vmem:[%s269] sm:$0xf]
        %v276 = vunpack.c.l.b16 %v263
        %v277 = vunpack.c.l.b16 %v264
        %v278 = vunpack.c.l.b16 %v265
        %v279 = vunpack.c.l.b16 %v266
        %v280 = vunpack.c.l.b16 %v268
        %v281 = vpack.c.b16 %v277, %v276
        %v282 = vpack.c.b16 %v279, %v278
        %v283 = vpack.c.b16 %v280, %v280
        %vm284 = vsmask.f32 7424
        %v286 = vshrl.u32 %v281, 16
        %v288 = vshll.u32 %v281, 16
        %v290 = vrot.slane %v288, 1
        %v291 = vor.u32 %v286, %v290
        %v293 = vshll.u32 %v282, 16
        %v295 = vrot.slane %v293, 1
        %v296 = vsel %vm284, %v291, %v295
        %v297 = vshrl.u32 %v282, 16
        %v299 = vor.u32 %v297, %v295
        %v301 = vshll.u32 %v283, 16
        %v303 = vrot.slane %v301, 1
        %v304 = vsel %vm284, %v299, %v303
        %vm305 = vcmask 64512
        %v307 = vsel %vm305, %v296, 0
        %v310 = vsel %vm305, %v304, 0
        %vm312 = vcmask 1043456
        %v314 = vsel %vm312, %v270, 0
        %316 = vmatprep.subr.bf16.mxu0 0
        %317 = vmatpush1.bf16.msra.mxu0 0
        %318 = vmatprep.subr.bf16.mxu0 0
        %319 = vmatpush1.bf16.msra.mxu0 0
        %320 = vmatprep.subr.bf16.mxu0 0
        %321 = vmatpush1.bf16.msra.mxu0 0
        %322 = vmatprep.subr.bf16.mxu0 0
        %323 = vmatpush1.bf16.msra.mxu0 0
        %324 = vmatprep.subr.bf16.mxu0 0
        %325 = vmatpush1.bf16.msra.mxu0 0
        %326 = vmatprep.subr.bf16.mxu0 0
        %327 = vmatpush1.bf16.msra.mxu0 0
        %328 = vmatprep.subr.bf16.mxu0 0
        %329 = vmatpush1.bf16.msra.mxu0 0
        %330 = vmatprep.subr.bf16.mxu0 0
        %331 = vmatpush1.bf16.msra.mxu0 %v314
        %332 = vmatprep.subr.bf16.mxu0 0
        %333 = vmatpush2.bf16.msra.mxu0 0
        %334 = vmatprep.subr.bf16.mxu0 0
        %335 = vmatpush2.bf16.msra.mxu0 0
        %336 = vmatprep.subr.bf16.mxu0 0
        %337 = vmatpush2.bf16.msra.mxu0 0
        %338 = vmatprep.subr.bf16.mxu0 0
        %339 = vmatpush2.bf16.msra.mxu0 0
        %340 = vmatprep.subr.bf16.mxu0 0
        %341 = vmatpush2.bf16.msra.mxu0 0
        %342 = vmatprep.subr.bf16.mxu0 0
        %343 = vmatpush2.bf16.msra.mxu0 0
        %344 = vmatprep.subr.bf16.mxu0 0
        %345 = vmatpush2.bf16.msra.mxu0 0
        %346 = vmatprep.subr.bf16.mxu0 0
        %347 = vmatpush2.bf16.msra.mxu0 0
        %348 = vmatprep.mubr.bf16.mxu0 0
        %349 = vmatmul.mubr.bf16.gmra.mxu0 %v307
        %v350 = vpop.f32.mrf.mxu0
        %v351 = vadd.f32 0.0, %v350
        %v352 = vpop.f32.mrf.mxu0
        %v353 = vpop.f32.mrf.mxu0
        %v354 = vadd.f32 0.0, %v353
        %v355 = vpop.f32.mrf.mxu0
        %356 = vmatprep.mubr.bf16.mxu0 0
        %357 = vmatmul.mubr.bf16.gmra.mxu0 %v310
        %v358 = vpop.f32.mrf.mxu0
        %v359 = vadd.f32 0.0, %v358
        %v360 = vpop.f32.mrf.mxu0
        %v361 = vpop.f32.mrf.mxu0
        %v362 = vadd.f32 0.0, %v361
        %v363 = vpop.f32.mrf.mxu0
        %364 = vdwg.mxu0
        %v365 = vsel %vm305, %v281, 0
        %v367 = vsel %vm305, %v282, 0
        %v370 = vsel %vm312, %v267, 0
        %372 = vmatprep.subr.bf16.mxu0 0
        %373 = vmatpush1.bf16.msra.mxu0 0
        %374 = vmatprep.subr.bf16.mxu0 0
        %375 = vmatpush1.bf16.msra.mxu0 0
        %376 = vmatprep.subr.bf16.mxu0 0
        %377 = vmatpush1.bf16.msra.mxu0 0
        %378 = vmatprep.subr.bf16.mxu0 0
        %379 = vmatpush1.bf16.msra.mxu0 0
        %380 = vmatprep.subr.bf16.mxu0 0
        %381 = vmatpush1.bf16.msra.mxu0 0
        %382 = vmatprep.subr.bf16.mxu0 0
        %383 = vmatpush1.bf16.msra.mxu0 0
        %384 = vmatprep.subr.bf16.mxu0 0
        %385 = vmatpush1.bf16.msra.mxu0 0
        %386 = vmatprep.subr.bf16.mxu0 0
        %387 = vmatpush1.bf16.msra.mxu0 %v370
        %388 = vmatprep.subr.bf16.mxu0 0
        %389 = vmatpush2.bf16.msra.mxu0 0
        %390 = vmatprep.subr.bf16.mxu0 0
        %391 = vmatpush2.bf16.msra.mxu0 0
        %392 = vmatprep.subr.bf16.mxu0 0
        %393 = vmatpush2.bf16.msra.mxu0 0
        %394 = vmatprep.subr.bf16.mxu0 0
        %395 = vmatpush2.bf16.msra.mxu0 0
        %396 = vmatprep.subr.bf16.mxu0 0
        %397 = vmatpush2.bf16.msra.mxu0 0
        %398 = vmatprep.subr.bf16.mxu0 0
        %399 = vmatpush2.bf16.msra.mxu0 0
        %400 = vmatprep.subr.bf16.mxu0 0
        %401 = vmatpush2.bf16.msra.mxu0 0
        %402 = vmatprep.subr.bf16.mxu0 0
        %403 = vmatpush2.bf16.msra.mxu0 0
        %404 = vmatprep.mubr.bf16.mxu0 0
        %405 = vmatmul.mubr.bf16.gmra.mxu0 %v365
        %v406 = vpop.f32.mrf.mxu0
        %v407 = vadd.f32 %v351, %v406
        %v408 = vpop.f32.mrf.mxu0
        %v409 = vpop.f32.mrf.mxu0
        %v410 = vadd.f32 %v354, %v409
        %v411 = vpop.f32.mrf.mxu0
        %412 = vmatprep.mubr.bf16.mxu0 0
        %413 = vmatmul.mubr.bf16.gmra.mxu0 %v367
        %v414 = vpop.f32.mrf.mxu0
        %v415 = vadd.f32 %v359, %v414
        %v416 = vpop.f32.mrf.mxu0
        %v417 = vpop.f32.mrf.mxu0
        %v418 = vadd.f32 %v362, %v417
        %v419 = vpop.f32.mrf.mxu0
        %420 = vdwg.mxu0
        %v421 = vld [vmem:[#allocation2] sm:$0xe]
        %s422 = scalar_lea.vmem %s2, 8
        %v423 = vld [vmem:[%s422] sm:$0xf]
        %v425 = vunpack.c.l.b16 %v421
        %v426 = vpack.c.b16 %v277, %v425
        %vm427 = vcmask 1046528
        %v428 = vrot.slane %v426, 1
        %v429 = vrot.slane %v282, 1
        %v430 = vsel %vm427, %v428, %v429
        %v431 = vrot.slane %v283, 1
        %v432 = vsel %vm427, %v429, %v431
        %v434 = vsel %vm305, %v430, 0
        %v437 = vsel %vm305, %v432, 0
        %v440 = vsel %vm312, %v423, 0
        %442 = vmatprep.subr.bf16.mxu0 0
        %443 = vmatpush1.bf16.msra.mxu0 0
        %444 = vmatprep.subr.bf16.mxu0 0
        %445 = vmatpush1.bf16.msra.mxu0 0
        %446 = vmatprep.subr.bf16.mxu0 0
        %447 = vmatpush1.bf16.msra.mxu0 0
        %448 = vmatprep.subr.bf16.mxu0 0
        %449 = vmatpush1.bf16.msra.mxu0 0
        %450 = vmatprep.subr.bf16.mxu0 0
        %451 = vmatpush1.bf16.msra.mxu0 0
        %452 = vmatprep.subr.bf16.mxu0 0
        %453 = vmatpush1.bf16.msra.mxu0 0
        %454 = vmatprep.subr.bf16.mxu0 0
        %455 = vmatpush1.bf16.msra.mxu0 0
        %456 = vmatprep.subr.bf16.mxu0 0
        %457 = vmatpush1.bf16.msra.mxu0 %v440
        %458 = vmatprep.subr.bf16.mxu0 0
        %459 = vmatpush2.bf16.msra.mxu0 0
        %460 = vmatprep.subr.bf16.mxu0 0
        %461 = vmatpush2.bf16.msra.mxu0 0
        %462 = vmatprep.subr.bf16.mxu0 0
        %463 = vmatpush2.bf16.msra.mxu0 0
        %464 = vmatprep.subr.bf16.mxu0 0
        %465 = vmatpush2.bf16.msra.mxu0 0
        %466 = vmatprep.subr.bf16.mxu0 0
        %467 = vmatpush2.bf16.msra.mxu0 0
        %468 = vmatprep.subr.bf16.mxu0 0
        %469 = vmatpush2.bf16.msra.mxu0 0
        %470 = vmatprep.subr.bf16.mxu0 0
        %471 = vmatpush2.bf16.msra.mxu0 0
        %472 = vmatprep.subr.bf16.mxu0 0
        %473 = vmatpush2.bf16.msra.mxu0 0
        %474 = vmatprep.mubr.bf16.mxu0 0
        %475 = vmatmul.mubr.bf16.gmra.mxu0 %v434
        %v476 = vpop.f32.mrf.mxu0
        %v477 = vadd.f32 0.0, %v476
        %v478 = vpop.f32.mrf.mxu0
        %v479 = vpop.f32.mrf.mxu0
        %v480 = vadd.f32 0.0, %v479
        %v481 = vpop.f32.mrf.mxu0
        %482 = vmatprep.mubr.bf16.mxu0 0
        %483 = vmatmul.mubr.bf16.gmra.mxu0 %v437
        %v484 = vpop.f32.mrf.mxu0
        %v485 = vadd.f32 0.0, %v484
        %v486 = vpop.f32.mrf.mxu0
        %v487 = vpop.f32.mrf.mxu0
        %v488 = vadd.f32 0.0, %v487
        %v489 = vpop.f32.mrf.mxu0
        %490 = vdwg.mxu0
        %v491 = vadd.f32 %v407, %v477
        %v492 = vadd.f32 %v410, %v480
        %v493 = vadd.f32 %v415, %v485
        %v494 = vadd.f32 %v418, %v488
        %v495 = vld [vmem:[#allocation2 + $0x10] sm:$0x3]
        %s496 = scalar_lea.vmem %s2, 12
        %v497 = vld [vmem:[%s496] sm:$0xf]
        %v499 = vunpack.c.l.b16 %v495
        %v500 = vpack.c.b16 %v499, %v499
        %vm501 = vsmask.f32 6400
        %v503 = vshrl.u32 %v426, 16
        %v505 = vrot.slane %v503, 1
        %v506 = vshll.u32 %v426, 16
        %v508 = vrot.slane %v506, 2
        %v509 = vor.u32 %v505, %v508
        %v510 = vrot.slane %v297, 1
        %v511 = vrot.slane %v293, 2
        %v512 = vor.u32 %v510, %v511
        %v513 = vsel %vm501, %v509, %v512
        %v515 = vshrl.u32 %v500, 16
        %v517 = vrot.slane %v515, 1
        %v518 = vshll.u32 %v500, 16
        %v520 = vrot.slane %v518, 2
        %v521 = vor.u32 %v517, %v520
        %v522 = vsel %vm501, %v512, %v521
        %v524 = vsel %vm305, %v513, 0
        %v527 = vsel %vm305, %v522, 0
        %v530 = vsel %vm312, %v497, 0
        %532 = vmatprep.subr.bf16.mxu0 0
        %533 = vmatpush1.bf16.msra.mxu0 0
        %534 = vmatprep.subr.bf16.mxu0 0
        %535 = vmatpush1.bf16.msra.mxu0 0
        %536 = vmatprep.subr.bf16.mxu0 0
        %537 = vmatpush1.bf16.msra.mxu0 0
        %538 = vmatprep.subr.bf16.mxu0 0
        %539 = vmatpush1.bf16.msra.mxu0 0
        %540 = vmatprep.subr.bf16.mxu0 0
        %541 = vmatpush1.bf16.msra.mxu0 0
        %542 = vmatprep.subr.bf16.mxu0 0
        %543 = vmatpush1.bf16.msra.mxu0 0
        %544 = vmatprep.subr.bf16.mxu0 0
        %545 = vmatpush1.bf16.msra.mxu0 0
        %546 = vmatprep.subr.bf16.mxu0 0
        %547 = vmatpush1.bf16.msra.mxu0 %v530
        %548 = vmatprep.subr.bf16.mxu0 0
        %549 = vmatpush2.bf16.msra.mxu0 0
        %550 = vmatprep.subr.bf16.mxu0 0
        %551 = vmatpush2.bf16.msra.mxu0 0
        %552 = vmatprep.subr.bf16.mxu0 0
        %553 = vmatpush2.bf16.msra.mxu0 0
        %554 = vmatprep.subr.bf16.mxu0 0
        %555 = vmatpush2.bf16.msra.mxu0 0
        %556 = vmatprep.subr.bf16.mxu0 0
        %557 = vmatpush2.bf16.msra.mxu0 0
        %558 = vmatprep.subr.bf16.mxu0 0
        %559 = vmatpush2.bf16.msra.mxu0 0
        %560 = vmatprep.subr.bf16.mxu0 0
        %561 = vmatpush2.bf16.msra.mxu0 0
        %562 = vmatprep.subr.bf16.mxu0 0
        %563 = vmatpush2.bf16.msra.mxu0 0
        %564 = vmatprep.mubr.bf16.mxu0 0
        %565 = vmatmul.mubr.bf16.gmra.mxu0 %v524
        %v566 = vpop.f32.mrf.mxu0
        %v567 = vadd.f32 0.0, %v566
        %v568 = vpop.f32.mrf.mxu0
        %v569 = vpop.f32.mrf.mxu0
        %v570 = vadd.f32 0.0, %v569
        %v571 = vpop.f32.mrf.mxu0
        %572 = vmatprep.mubr.bf16.mxu0 0
        %573 = vmatmul.mubr.bf16.gmra.mxu0 %v527
        %v574 = vpop.f32.mrf.mxu0
        %v575 = vadd.f32 0.0, %v574
        %v576 = vpop.f32.mrf.mxu0
        %v577 = vpop.f32.mrf.mxu0
        %v578 = vadd.f32 0.0, %v577
        %v579 = vpop.f32.mrf.mxu0
        %580 = vdwg.mxu0
        %v581 = vadd.f32 %v491, %v567
        %v582 = vadd.f32 %v492, %v570
        %v583 = vadd.f32 %v493, %v575
        %v584 = vadd.f32 %v494, %v578
        %v585 = vld [vmem:[#allocation2] sm:$0xc]
        %s586 = scalar_lea.vmem %s2, 16
        %v587 = vld [vmem:[%s586] sm:$0xf]
        %v589 = vunpack.c.l.b16 %v585
        %v590 = vpack.c.b16 %v277, %v589
        %vm591 = vcmask 1045504
        %v592 = vrot.slane %v590, 2
        %v593 = vrot.slane %v282, 2
        %v594 = vsel %vm591, %v592, %v593
        %v595 = vrot.slane %v500, 2
        %v596 = vsel %vm591, %v593, %v595
        %v598 = vsel %vm305, %v594, 0
        %v601 = vsel %vm305, %v596, 0
        %v604 = vsel %vm312, %v587, 0
        %606 = vmatprep.subr.bf16.mxu0 0
        %607 = vmatpush1.bf16.msra.mxu0 0
        %608 = vmatprep.subr.bf16.mxu0 0
        %609 = vmatpush1.bf16.msra.mxu0 0
        %610 = vmatprep.subr.bf16.mxu0 0
        %611 = vmatpush1.bf16.msra.mxu0 0
        %612 = vmatprep.subr.bf16.mxu0 0
        %613 = vmatpush1.bf16.msra.mxu0 0
        %614 = vmatprep.subr.bf16.mxu0 0
        %615 = vmatpush1.bf16.msra.mxu0 0
        %616 = vmatprep.subr.bf16.mxu0 0
        %617 = vmatpush1.bf16.msra.mxu0 0
        %618 = vmatprep.subr.bf16.mxu0 0
        %619 = vmatpush1.bf16.msra.mxu0 0
        %620 = vmatprep.subr.bf16.mxu0 0
        %621 = vmatpush1.bf16.msra.mxu0 %v604
        %622 = vmatprep.subr.bf16.mxu0 0
        %623 = vmatpush2.bf16.msra.mxu0 0
        %624 = vmatprep.subr.bf16.mxu0 0
        %625 = vmatpush2.bf16.msra.mxu0 0
        %626 = vmatprep.subr.bf16.mxu0 0
        %627 = vmatpush2.bf16.msra.mxu0 0
        %628 = vmatprep.subr.bf16.mxu0 0
        %629 = vmatpush2.bf16.msra.mxu0 0
        %630 = vmatprep.subr.bf16.mxu0 0
        %631 = vmatpush2.bf16.msra.mxu0 0
        %632 = vmatprep.subr.bf16.mxu0 0
        %633 = vmatpush2.bf16.msra.mxu0 0
        %634 = vmatprep.subr.bf16.mxu0 0
        %635 = vmatpush2.bf16.msra.mxu0 0
        %636 = vmatprep.subr.bf16.mxu0 0
        %637 = vmatpush2.bf16.msra.mxu0 0
        %638 = vmatprep.mubr.bf16.mxu0 0
        %639 = vmatmul.mubr.bf16.gmra.mxu0 %v598
        %v640 = vpop.f32.mrf.mxu0
        %v641 = vadd.f32 0.0, %v640
        %v642 = vpop.f32.mrf.mxu0
        %v643 = vpop.f32.mrf.mxu0
        %v644 = vadd.f32 0.0, %v643
        %v645 = vpop.f32.mrf.mxu0
        %646 = vmatprep.mubr.bf16.mxu0 0
        %647 = vmatmul.mubr.bf16.gmra.mxu0 %v601
        %v648 = vpop.f32.mrf.mxu0
        %v649 = vadd.f32 0.0, %v648
        %v650 = vpop.f32.mrf.mxu0
        %v651 = vpop.f32.mrf.mxu0
        %v652 = vadd.f32 0.0, %v651
        %v653 = vpop.f32.mrf.mxu0
        %654 = vdwg.mxu0
        %v655 = vadd.f32 %v581, %v641
        %v656 = vadd.f32 %v582, %v644
        %v657 = vadd.f32 %v583, %v649
        %v658 = vadd.f32 %v584, %v652
        %v659 = vld [vmem:[#allocation2 + $0x10] sm:$0x7]
        %s660 = scalar_lea.vmem %s2, 20
        %v661 = vld [vmem:[%s660] sm:$0xf]
        %v663 = vunpack.c.l.b16 %v659
        %v664 = vpack.c.b16 %v663, %v663
        %vm665 = vsmask.f32 5376
        %v667 = vshrl.u32 %v590, 16
        %v669 = vrot.slane %v667, 2
        %v670 = vshll.u32 %v590, 16
        %v672 = vrot.slane %v670, 3
        %v673 = vor.u32 %v669, %v672
        %v674 = vrot.slane %v297, 2
        %v675 = vrot.slane %v293, 3
        %v676 = vor.u32 %v674, %v675
        %v677 = vsel %vm665, %v673, %v676
        %v679 = vshrl.u32 %v664, 16
        %v681 = vrot.slane %v679, 2
        %v682 = vshll.u32 %v664, 16
        %v684 = vrot.slane %v682, 3
        %v685 = vor.u32 %v681, %v684
        %v686 = vsel %vm665, %v676, %v685
        %v688 = vsel %vm305, %v677, 0
        %v691 = vsel %vm305, %v686, 0
        %v694 = vsel %vm312, %v661, 0
        %696 = vmatprep.subr.bf16.mxu0 0
        %697 = vmatpush1.bf16.msra.mxu0 0
        %698 = vmatprep.subr.bf16.mxu0 0
        %699 = vmatpush1.bf16.msra.mxu0 0
        %700 = vmatprep.subr.bf16.mxu0 0
        %701 = vmatpush1.bf16.msra.mxu0 0
        %702 = vmatprep.subr.bf16.mxu0 0
        %703 = vmatpush1.bf16.msra.mxu0 0
        %704 = vmatprep.subr.bf16.mxu0 0
        %705 = vmatpush1.bf16.msra.mxu0 0
        %706 = vmatprep.subr.bf16.mxu0 0
        %707 = vmatpush1.bf16.msra.mxu0 0
        %708 = vmatprep.subr.bf16.mxu0 0
        %709 = vmatpush1.bf16.msra.mxu0 0
        %710 = vmatprep.subr.bf16.mxu0 0
        %711 = vmatpush1.bf16.msra.mxu0 %v694
        %712 = vmatprep.subr.bf16.mxu0 0
        %713 = vmatpush2.bf16.msra.mxu0 0
        %714 = vmatprep.subr.bf16.mxu0 0
        %715 = vmatpush2.bf16.msra.mxu0 0
        %716 = vmatprep.subr.bf16.mxu0 0
        %717 = vmatpush2.bf16.msra.mxu0 0
        %718 = vmatprep.subr.bf16.mxu0 0
        %719 = vmatpush2.bf16.msra.mxu0 0
        %720 = vmatprep.subr.bf16.mxu0 0
        %721 = vmatpush2.bf16.msra.mxu0 0
        %722 = vmatprep.subr.bf16.mxu0 0
        %723 = vmatpush2.bf16.msra.mxu0 0
        %724 = vmatprep.subr.bf16.mxu0 0
        %725 = vmatpush2.bf16.msra.mxu0 0
        %726 = vmatprep.subr.bf16.mxu0 0
        %727 = vmatpush2.bf16.msra.mxu0 0
        %728 = vmatprep.mubr.bf16.mxu0 0
        %729 = vmatmul.mubr.bf16.gmra.mxu0 %v688
        %v730 = vpop.f32.mrf.mxu0
        %v731 = vadd.f32 0.0, %v730
        %v732 = vpop.f32.mrf.mxu0
        %v733 = vpop.f32.mrf.mxu0
        %v734 = vadd.f32 0.0, %v733
        %v735 = vpop.f32.mrf.mxu0
        %736 = vmatprep.mubr.bf16.mxu0 0
        %737 = vmatmul.mubr.bf16.gmra.mxu0 %v691
        %v738 = vpop.f32.mrf.mxu0
        %v739 = vadd.f32 0.0, %v738
        %v740 = vpop.f32.mrf.mxu0
        %v741 = vpop.f32.mrf.mxu0
        %v742 = vadd.f32 0.0, %v741
        %v743 = vpop.f32.mrf.mxu0
        %744 = vdwg.mxu0
        %v745 = vadd.f32 %v655, %v731
        %v746 = vadd.f32 %v656, %v734
        %v747 = vadd.f32 %v657, %v739
        %v748 = vadd.f32 %v658, %v742
        %v749 = vld [vmem:[#allocation2] sm:$0x8]
        %s750 = scalar_lea.vmem %s2, 24
        %v751 = vld [vmem:[%s750] sm:$0xf]
        %v753 = vunpack.c.l.b16 %v749
        %v754 = vpack.c.b16 %v277, %v753
        %vm755 = vcmask 1044480
        %v756 = vrot.slane %v754, 3
        %v757 = vrot.slane %v282, 3
        %v758 = vsel %vm755, %v756, %v757
        %v759 = vrot.slane %v664, 3
        %v760 = vsel %vm755, %v757, %v759
        %v762 = vsel %vm305, %v758, 0
        %v765 = vsel %vm305, %v760, 0
        %v768 = vsel %vm312, %v751, 0
        %770 = vmatprep.subr.bf16.mxu0 0
        %771 = vmatpush1.bf16.msra.mxu0 0
        %772 = vmatprep.subr.bf16.mxu0 0
        %773 = vmatpush1.bf16.msra.mxu0 0
        %774 = vmatprep.subr.bf16.mxu0 0
        %775 = vmatpush1.bf16.msra.mxu0 0
        %776 = vmatprep.subr.bf16.mxu0 0
        %777 = vmatpush1.bf16.msra.mxu0 0
        %778 = vmatprep.subr.bf16.mxu0 0
        %779 = vmatpush1.bf16.msra.mxu0 0
        %780 = vmatprep.subr.bf16.mxu0 0
        %781 = vmatpush1.bf16.msra.mxu0 0
        %782 = vmatprep.subr.bf16.mxu0 0
        %783 = vmatpush1.bf16.msra.mxu0 0
        %784 = vmatprep.subr.bf16.mxu0 0
        %785 = vmatpush1.bf16.msra.mxu0 %v768
        %786 = vmatprep.subr.bf16.mxu0 0
        %787 = vmatpush2.bf16.msra.mxu0 0
        %788 = vmatprep.subr.bf16.mxu0 0
        %789 = vmatpush2.bf16.msra.mxu0 0
        %790 = vmatprep.subr.bf16.mxu0 0
        %791 = vmatpush2.bf16.msra.mxu0 0
        %792 = vmatprep.subr.bf16.mxu0 0
        %793 = vmatpush2.bf16.msra.mxu0 0
        %794 = vmatprep.subr.bf16.mxu0 0
        %795 = vmatpush2.bf16.msra.mxu0 0
        %796 = vmatprep.subr.bf16.mxu0 0
        %797 = vmatpush2.bf16.msra.mxu0 0
        %798 = vmatprep.subr.bf16.mxu0 0
        %799 = vmatpush2.bf16.msra.mxu0 0
        %800 = vmatprep.subr.bf16.mxu0 0
        %801 = vmatpush2.bf16.msra.mxu0 0
        %802 = vmatprep.mubr.bf16.mxu0 0
        %803 = vmatmul.mubr.bf16.gmra.mxu0 %v762
        %v804 = vpop.f32.mrf.mxu0
        %v805 = vadd.f32 0.0, %v804
        %v806 = vpop.f32.mrf.mxu0
        %v807 = vpop.f32.mrf.mxu0
        %v808 = vadd.f32 0.0, %v807
        %v809 = vpop.f32.mrf.mxu0
        %810 = vmatprep.mubr.bf16.mxu0 0
        %811 = vmatmul.mubr.bf16.gmra.mxu0 %v765
        %v812 = vpop.f32.mrf.mxu0
        %v813 = vadd.f32 0.0, %v812
        %v814 = vpop.f32.mrf.mxu0
        %v815 = vpop.f32.mrf.mxu0
        %v816 = vadd.f32 0.0, %v815
        %v817 = vpop.f32.mrf.mxu0
        %818 = vdwg.mxu0
        %v819 = vadd.f32 %v745, %v805
        %v820 = vadd.f32 %v746, %v808
        %v821 = vadd.f32 %v747, %v813
        %v822 = vadd.f32 %v748, %v816
        %v823 = vld [vmem:[#allocation2 + $0x10] sm:$0xf]
        %s824 = scalar_lea.vmem %s2, 28
        %v825 = vld [vmem:[%s824] sm:$0xf]
        %v827 = vunpack.c.l.b16 %v823
        %v828 = vpack.c.b16 %v827, %v827
        %vm829 = vsmask.f32 4352
        %v831 = vshrl.u32 %v754, 16
        %v833 = vrot.slane %v831, 3
        %v834 = vshll.u32 %v754, 16
        %v836 = vrot.slane %v834, 4
        %v837 = vor.u32 %v833, %v836
        %v838 = vrot.slane %v297, 3
        %v839 = vrot.slane %v293, 4
        %v840 = vor.u32 %v838, %v839
        %v841 = vsel %vm829, %v837, %v840
        %v843 = vshrl.u32 %v828, 16
        %v845 = vrot.slane %v843, 3
        %v846 = vshll.u32 %v828, 16
        %v848 = vrot.slane %v846, 4
        %v849 = vor.u32 %v845, %v848
        %v850 = vsel %vm829, %v840, %v849
        %v852 = vsel %vm305, %v841, 0
        %v855 = vsel %vm305, %v850, 0
        %v858 = vsel %vm312, %v825, 0
        %860 = vmatprep.subr.bf16.mxu0 0
        %861 = vmatpush1.bf16.msra.mxu0 0
        %862 = vmatprep.subr.bf16.mxu0 0
        %863 = vmatpush1.bf16.msra.mxu0 0
        %864 = vmatprep.subr.bf16.mxu0 0
        %865 = vmatpush1.bf16.msra.mxu0 0
        %866 = vmatprep.subr.bf16.mxu0 0
        %867 = vmatpush1.bf16.msra.mxu0 0
        %868 = vmatprep.subr.bf16.mxu0 0
        %869 = vmatpush1.bf16.msra.mxu0 0
        %870 = vmatprep.subr.bf16.mxu0 0
        %871 = vmatpush1.bf16.msra.mxu0 0
        %872 = vmatprep.subr.bf16.mxu0 0
        %873 = vmatpush1.bf16.msra.mxu0 0
        %874 = vmatprep.subr.bf16.mxu0 0
        %875 = vmatpush1.bf16.msra.mxu0 %v858
        %876 = vmatprep.subr.bf16.mxu0 0
        %877 = vmatpush2.bf16.msra.mxu0 0
        %878 = vmatprep.subr.bf16.mxu0 0
        %879 = vmatpush2.bf16.msra.mxu0 0
        %880 = vmatprep.subr.bf16.mxu0 0
        %881 = vmatpush2.bf16.msra.mxu0 0
        %882 = vmatprep.subr.bf16.mxu0 0
        %883 = vmatpush2.bf16.msra.mxu0 0
        %884 = vmatprep.subr.bf16.mxu0 0
        %885 = vmatpush2.bf16.msra.mxu0 0
        %886 = vmatprep.subr.bf16.mxu0 0
        %887 = vmatpush2.bf16.msra.mxu0 0
        %888 = vmatprep.subr.bf16.mxu0 0
        %889 = vmatpush2.bf16.msra.mxu0 0
        %890 = vmatprep.subr.bf16.mxu0 0
        %891 = vmatpush2.bf16.msra.mxu0 0
        %892 = vmatprep.mubr.bf16.mxu0 0
        %893 = vmatmul.mubr.bf16.gmra.mxu0 %v852
        %v894 = vpop.f32.mrf.mxu0
        %v895 = vadd.f32 0.0, %v894
        %v896 = vpop.f32.mrf.mxu0
        %v897 = vpop.f32.mrf.mxu0
        %v898 = vadd.f32 0.0, %v897
        %v899 = vpop.f32.mrf.mxu0
        %900 = vmatprep.mubr.bf16.mxu0 0
        %901 = vmatmul.mubr.bf16.gmra.mxu0 %v855
        %v902 = vpop.f32.mrf.mxu0
        %v903 = vadd.f32 0.0, %v902
        %v904 = vpop.f32.mrf.mxu0
        %v905 = vpop.f32.mrf.mxu0
        %v906 = vadd.f32 0.0, %v905
        %v907 = vpop.f32.mrf.mxu0
        %908 = vdwg.mxu0
        %v909 = vadd.f32 %v819, %v895
        %v910 = vadd.f32 %v820, %v898
        %v911 = vadd.f32 %v821, %v903
        %v912 = vadd.f32 %v822, %v906
        %s913 = scalar_lea.vmem %s2, 32
        %v914 = vld [vmem:[%s913] sm:$0xf]
        %v915 = vpack.c.b16 %v278, %v277
        %v916 = vpack.c.b16 %v827, %v279
        %v918 = vsel %vm305, %v915, 0
        %v921 = vsel %vm305, %v916, 0
        %v924 = vsel %vm312, %v914, 0
        %926 = vmatprep.subr.bf16.mxu0 0
        %927 = vmatpush1.bf16.msra.mxu0 0
        %928 = vmatprep.subr.bf16.mxu0 0
        %929 = vmatpush1.bf16.msra.mxu0 0
        %930 = vmatprep.subr.bf16.mxu0 0
        %931 = vmatpush1.bf16.msra.mxu0 0
        %932 = vmatprep.subr.bf16.mxu0 0
        %933 = vmatpush1.bf16.msra.mxu0 0
        %934 = vmatprep.subr.bf16.mxu0 0
        %935 = vmatpush1.bf16.msra.mxu0 0
        %936 = vmatprep.subr.bf16.mxu0 0
        %937 = vmatpush1.bf16.msra.mxu0 0
        %938 = vmatprep.subr.bf16.mxu0 0
        %939 = vmatpush1.bf16.msra.mxu0 0
        %940 = vmatprep.subr.bf16.mxu0 0
        %941 = vmatpush1.bf16.msra.mxu0 %v924
        %942 = vmatprep.subr.bf16.mxu0 0
        %943 = vmatpush2.bf16.msra.mxu0 0
        %944 = vmatprep.subr.bf16.mxu0 0
        %945 = vmatpush2.bf16.msra.mxu0 0
        %946 = vmatprep.subr.bf16.mxu0 0
        %947 = vmatpush2.bf16.msra.mxu0 0
        %948 = vmatprep.subr.bf16.mxu0 0
        %949 = vmatpush2.bf16.msra.mxu0 0
        %950 = vmatprep.subr.bf16.mxu0 0
        %951 = vmatpush2.bf16.msra.mxu0 0
        %952 = vmatprep.subr.bf16.mxu0 0
        %953 = vmatpush2.bf16.msra.mxu0 0
        %954 = vmatprep.subr.bf16.mxu0 0
        %955 = vmatpush2.bf16.msra.mxu0 0
        %956 = vmatprep.subr.bf16.mxu0 0
        %957 = vmatpush2.bf16.msra.mxu0 0
        %958 = vmatprep.mubr.bf16.mxu0 0
        %959 = vmatmul.mubr.bf16.gmra.mxu0 %v918
        %v960 = vpop.f32.mrf.mxu0
        %v961 = vadd.f32 0.0, %v960
        %v962 = vpop.f32.mrf.mxu0
        %v963 = vpop.f32.mrf.mxu0
        %v964 = vadd.f32 0.0, %v963
        %v965 = vpop.f32.mrf.mxu0
        %966 = vmatprep.mubr.bf16.mxu0 0
        %967 = vmatmul.mubr.bf16.gmra.mxu0 %v921
        %v968 = vpop.f32.mrf.mxu0
        %v969 = vadd.f32 0.0, %v968
        %v970 = vpop.f32.mrf.mxu0
        %v971 = vpop.f32.mrf.mxu0
        %v972 = vadd.f32 0.0, %v971
        %v973 = vpop.f32.mrf.mxu0
        %974 = vdwg.mxu0
        %v975 = vadd.f32 %v909, %v961
        %v976 = vadd.f32 %v910, %v964
        %v977 = vadd.f32 %v911, %v969
        %v978 = vadd.f32 %v912, %v972
        %v979 = vld [vmem:[#allocation2 + $0x4] sm:$0xf]
        %v980 = vld [vmem:[#allocation2 + $0x8] sm:$0xf]
        %v981 = vld [vmem:[#allocation2 + $0xc] sm:$0xf]
        %v982 = vld [vmem:[#allocation2 + $0x10] sm:$0xf]
        %v983 = vld [vmem:[#allocation2 + $0x14] sm:$0x1]
        %s984 = scalar_lea.vmem %s2, 36
        %v985 = vld [vmem:[%s984] sm:$0xf]
        %v991 = vunpack.c.l.b16 %v979
        %v992 = vunpack.c.l.b16 %v980
        %v993 = vunpack.c.l.b16 %v981
        %v994 = vunpack.c.l.b16 %v982
        %v995 = vunpack.c.l.b16 %v983
        %v996 = vpack.c.b16 %v992, %v991
        %v997 = vpack.c.b16 %v994, %v993
        %v998 = vpack.c.b16 %v995, %v995
        %v1000 = vshrl.u32 %v996, 16
        %v1002 = vshll.u32 %v996, 16
        %v1004 = vrot.slane %v1002, 1
        %v1005 = vor.u32 %v1000, %v1004
        %v1007 = vshll.u32 %v997, 16
        %v1009 = vrot.slane %v1007, 1
        %v1010 = vsel %vm284, %v1005, %v1009
        %v1011 = vshrl.u32 %v997, 16
        %v1013 = vor.u32 %v1011, %v1009
        %v1015 = vshll.u32 %v998, 16
        %v1017 = vrot.slane %v1015, 1
        %v1018 = vsel %vm284, %v1013, %v1017
        %v1020 = vsel %vm305, %v1010, 0
        %v1023 = vsel %vm305, %v1018, 0
        %v1026 = vsel %vm312, %v985, 0
        %1028 = vmatprep.subr.bf16.mxu0 0
        %1029 = vmatpush1.bf16.msra.mxu0 0
        %1030 = vmatprep.subr.bf16.mxu0 0
        %1031 = vmatpush1.bf16.msra.mxu0 0
        %1032 = vmatprep.subr.bf16.mxu0 0
        %1033 = vmatpush1.bf16.msra.mxu0 0
        %1034 = vmatprep.subr.bf16.mxu0 0
        %1035 = vmatpush1.bf16.msra.mxu0 0
        %1036 = vmatprep.subr.bf16.mxu0 0
        %1037 = vmatpush1.bf16.msra.mxu0 0
        %1038 = vmatprep.subr.bf16.mxu0 0
        %1039 = vmatpush1.bf16.msra.mxu0 0
        %1040 = vmatprep.subr.bf16.mxu0 0
        %1041 = vmatpush1.bf16.msra.mxu0 0
        %1042 = vmatprep.subr.bf16.mxu0 0
        %1043 = vmatpush1.bf16.msra.mxu0 %v1026
        %1044 = vmatprep.subr.bf16.mxu0 0
        %1045 = vmatpush2.bf16.msra.mxu0 0
        %1046 = vmatprep.subr.bf16.mxu0 0
        %1047 = vmatpush2.bf16.msra.mxu0 0
        %1048 = vmatprep.subr.bf16.mxu0 0
        %1049 = vmatpush2.bf16.msra.mxu0 0
        %1050 = vmatprep.subr.bf16.mxu0 0
        %1051 = vmatpush2.bf16.msra.mxu0 0
        %1052 = vmatprep.subr.bf16.mxu0 0
        %1053 = vmatpush2.bf16.msra.mxu0 0
        %1054 = vmatprep.subr.bf16.mxu0 0
        %1055 = vmatpush2.bf16.msra.mxu0 0
        %1056 = vmatprep.subr.bf16.mxu0 0
        %1057 = vmatpush2.bf16.msra.mxu0 0
        %1058 = vmatprep.subr.bf16.mxu0 0
        %1059 = vmatpush2.bf16.msra.mxu0 0
        %1060 = vmatprep.mubr.bf16.mxu0 0
        %1061 = vmatmul.mubr.bf16.gmra.mxu0 %v1020
        %v1062 = vpop.f32.mrf.mxu0
        %v1063 = vadd.f32 0.0, %v1062
        %v1064 = vpop.f32.mrf.mxu0
        %v1065 = vpop.f32.mrf.mxu0
        %v1066 = vadd.f32 0.0, %v1065
        %v1067 = vpop.f32.mrf.mxu0
        %1068 = vmatprep.mubr.bf16.mxu0 0
        %1069 = vmatmul.mubr.bf16.gmra.mxu0 %v1023
        %v1070 = vpop.f32.mrf.mxu0
        %v1071 = vadd.f32 0.0, %v1070
        %v1072 = vpop.f32.mrf.mxu0
        %v1073 = vpop.f32.mrf.mxu0
        %v1074 = vadd.f32 0.0, %v1073
        %v1075 = vpop.f32.mrf.mxu0
        %1076 = vdwg.mxu0
        %v1077 = vadd.f32 %v975, %v1063
        %v1078 = vadd.f32 %v976, %v1066
        %v1079 = vadd.f32 %v977, %v1071
        %v1080 = vadd.f32 %v978, %v1074
        %v1081 = vld [vmem:[#allocation2 + $0x4] sm:$0xe]
        %s1082 = scalar_lea.vmem %s2, 40
        %v1083 = vld [vmem:[%s1082] sm:$0xf]
        %v1085 = vunpack.c.l.b16 %v1081
        %v1086 = vpack.c.b16 %v992, %v1085
        %v1087 = vrot.slane %v1086, 1
        %v1088 = vrot.slane %v997, 1
        %v1089 = vsel %vm427, %v1087, %v1088
        %v1090 = vrot.slane %v998, 1
        %v1091 = vsel %vm427, %v1088, %v1090
        %v1093 = vsel %vm305, %v1089, 0
        %v1096 = vsel %vm305, %v1091, 0
        %v1099 = vsel %vm312, %v1083, 0
        %1101 = vmatprep.subr.bf16.mxu0 0
        %1102 = vmatpush1.bf16.msra.mxu0 0
        %1103 = vmatprep.subr.bf16.mxu0 0
        %1104 = vmatpush1.bf16.msra.mxu0 0
        %1105 = vmatprep.subr.bf16.mxu0 0
        %1106 = vmatpush1.bf16.msra.mxu0 0
        %1107 = vmatprep.subr.bf16.mxu0 0
        %1108 = vmatpush1.bf16.msra.mxu0 0
        %1109 = vmatprep.subr.bf16.mxu0 0
        %1110 = vmatpush1.bf16.msra.mxu0 0
        %1111 = vmatprep.subr.bf16.mxu0 0
        %1112 = vmatpush1.bf16.msra.mxu0 0
        %1113 = vmatprep.subr.bf16.mxu0 0
        %1114 = vmatpush1.bf16.msra.mxu0 0
        %1115 = vmatprep.subr.bf16.mxu0 0
        %1116 = vmatpush1.bf16.msra.mxu0 %v1099
        %1117 = vmatprep.subr.bf16.mxu0 0
        %1118 = vmatpush2.bf16.msra.mxu0 0
        %1119 = vmatprep.subr.bf16.mxu0 0
        %1120 = vmatpush2.bf16.msra.mxu0 0
        %1121 = vmatprep.subr.bf16.mxu0 0
        %1122 = vmatpush2.bf16.msra.mxu0 0
        %1123 = vmatprep.subr.bf16.mxu0 0
        %1124 = vmatpush2.bf16.msra.mxu0 0
        %1125 = vmatprep.subr.bf16.mxu0 0
        %1126 = vmatpush2.bf16.msra.mxu0 0
        %1127 = vmatprep.subr.bf16.mxu0 0
        %1128 = vmatpush2.bf16.msra.mxu0 0
        %1129 = vmatprep.subr.bf16.mxu0 0
        %1130 = vmatpush2.bf16.msra.mxu0 0
        %1131 = vmatprep.subr.bf16.mxu0 0
        %1132 = vmatpush2.bf16.msra.mxu0 0
        %1133 = vmatprep.mubr.bf16.mxu0 0
        %1134 = vmatmul.mubr.bf16.gmra.mxu0 %v1093
        %v1135 = vpop.f32.mrf.mxu0
        %v1136 = vadd.f32 0.0, %v1135
        %v1137 = vpop.f32.mrf.mxu0
        %v1138 = vpop.f32.mrf.mxu0
        %v1139 = vadd.f32 0.0, %v1138
        %v1140 = vpop.f32.mrf.mxu0
        %1141 = vmatprep.mubr.bf16.mxu0 0
        %1142 = vmatmul.mubr.bf16.gmra.mxu0 %v1096
        %v1143 = vpop.f32.mrf.mxu0
        %v1144 = vadd.f32 0.0, %v1143
        %v1145 = vpop.f32.mrf.mxu0
        %v1146 = vpop.f32.mrf.mxu0
        %v1147 = vadd.f32 0.0, %v1146
        %v1148 = vpop.f32.mrf.mxu0
        %1149 = vdwg.mxu0
        %v1150 = vadd.f32 %v1077, %v1136
        %v1151 = vadd.f32 %v1078, %v1139
        %v1152 = vadd.f32 %v1079, %v1144
        %v1153 = vadd.f32 %v1080, %v1147
        %v1154 = vld [vmem:[#allocation2 + $0x14] sm:$0x3]
        %s1155 = scalar_lea.vmem %s2, 44
        %v1156 = vld [vmem:[%s1155] sm:$0xf]
        %v1158 = vunpack.c.l.b16 %v1154
        %v1159 = vpack.c.b16 %v1158, %v1158
        %v1161 = vshrl.u32 %v1086, 16
        %v1163 = vrot.slane %v1161, 1
        %v1164 = vshll.u32 %v1086, 16
        %v1166 = vrot.slane %v1164, 2
        %v1167 = vor.u32 %v1163, %v1166
        %v1168 = vrot.slane %v1011, 1
        %v1169 = vrot.slane %v1007, 2
        %v1170 = vor.u32 %v1168, %v1169
        %v1171 = vsel %vm501, %v1167, %v1170
        %v1173 = vshrl.u32 %v1159, 16
        %v1175 = vrot.slane %v1173, 1
        %v1176 = vshll.u32 %v1159, 16
        %v1178 = vrot.slane %v1176, 2
        %v1179 = vor.u32 %v1175, %v1178
        %v1180 = vsel %vm501, %v1170, %v1179
        %v1182 = vsel %vm305, %v1171, 0
        %v1185 = vsel %vm305, %v1180, 0
        %v1188 = vsel %vm312, %v1156, 0
        %1190 = vmatprep.subr.bf16.mxu0 0
        %1191 = vmatpush1.bf16.msra.mxu0 0
        %1192 = vmatprep.subr.bf16.mxu0 0
        %1193 = vmatpush1.bf16.msra.mxu0 0
        %1194 = vmatprep.subr.bf16.mxu0 0
        %1195 = vmatpush1.bf16.msra.mxu0 0
        %1196 = vmatprep.subr.bf16.mxu0 0
        %1197 = vmatpush1.bf16.msra.mxu0 0
        %1198 = vmatprep.subr.bf16.mxu0 0
        %1199 = vmatpush1.bf16.msra.mxu0 0
        %1200 = vmatprep.subr.bf16.mxu0 0
        %1201 = vmatpush1.bf16.msra.mxu0 0
        %1202 = vmatprep.subr.bf16.mxu0 0
        %1203 = vmatpush1.bf16.msra.mxu0 0
        %1204 = vmatprep.subr.bf16.mxu0 0
        %1205 = vmatpush1.bf16.msra.mxu0 %v1188
        %1206 = vmatprep.subr.bf16.mxu0 0
        %1207 = vmatpush2.bf16.msra.mxu0 0
        %1208 = vmatprep.subr.bf16.mxu0 0
        %1209 = vmatpush2.bf16.msra.mxu0 0
        %1210 = vmatprep.subr.bf16.mxu0 0
        %1211 = vmatpush2.bf16.msra.mxu0 0
        %1212 = vmatprep.subr.bf16.mxu0 0
        %1213 = vmatpush2.bf16.msra.mxu0 0
        %1214 = vmatprep.subr.bf16.mxu0 0
        %1215 = vmatpush2.bf16.msra.mxu0 0
        %1216 = vmatprep.subr.bf16.mxu0 0
        %1217 = vmatpush2.bf16.msra.mxu0 0
        %1218 = vmatprep.subr.bf16.mxu0 0
        %1219 = vmatpush2.bf16.msra.mxu0 0
        %1220 = vmatprep.subr.bf16.mxu0 0
        %1221 = vmatpush2.bf16.msra.mxu0 0
        %1222 = vmatprep.mubr.bf16.mxu0 0
        %1223 = vmatmul.mubr.bf16.gmra.mxu0 %v1182
        %v1224 = vpop.f32.mrf.mxu0
        %v1225 = vadd.f32 0.0, %v1224
        %v1226 = vpop.f32.mrf.mxu0
        %v1227 = vpop.f32.mrf.mxu0
        %v1228 = vadd.f32 0.0, %v1227
        %v1229 = vpop.f32.mrf.mxu0
        %1230 = vmatprep.mubr.bf16.mxu0 0
        %1231 = vmatmul.mubr.bf16.gmra.mxu0 %v1185
        %v1232 = vpop.f32.mrf.mxu0
        %v1233 = vadd.f32 0.0, %v1232
        %v1234 = vpop.f32.mrf.mxu0
        %v1235 = vpop.f32.mrf.mxu0
        %v1236 = vadd.f32 0.0, %v1235
        %v1237 = vpop.f32.mrf.mxu0
        %1238 = vdwg.mxu0
        %v1239 = vadd.f32 %v1150, %v1225
        %v1240 = vadd.f32 %v1151, %v1228
        %v1241 = vadd.f32 %v1152, %v1233
        %v1242 = vadd.f32 %v1153, %v1236
        %v1243 = vld [vmem:[#allocation2 + $0x4] sm:$0xc]
        %s1244 = scalar_lea.vmem %s2, 48
        %v1245 = vld [vmem:[%s1244] sm:$0xf]
        %v1247 = vunpack.c.l.b16 %v1243
        %v1248 = vpack.c.b16 %v992, %v1247
        %v1249 = vrot.slane %v1248, 2
        %v1250 = vrot.slane %v997, 2
        %v1251 = vsel %vm591, %v1249, %v1250
        %v1252 = vrot.slane %v1159, 2
        %v1253 = vsel %vm591, %v1250, %v1252
        %v1255 = vsel %vm305, %v1251, 0
        %v1258 = vsel %vm305, %v1253, 0
        %v1261 = vsel %vm312, %v1245, 0
        %1263 = vmatprep.subr.bf16.mxu0 0
        %1264 = vmatpush1.bf16.msra.mxu0 0
        %1265 = vmatprep.subr.bf16.mxu0 0
        %1266 = vmatpush1.bf16.msra.mxu0 0
        %1267 = vmatprep.subr.bf16.mxu0 0
        %1268 = vmatpush1.bf16.msra.mxu0 0
        %1269 = vmatprep.subr.bf16.mxu0 0
        %1270 = vmatpush1.bf16.msra.mxu0 0
        %1271 = vmatprep.subr.bf16.mxu0 0
        %1272 = vmatpush1.bf16.msra.mxu0 0
        %1273 = vmatprep.subr.bf16.mxu0 0
        %1274 = vmatpush1.bf16.msra.mxu0 0
        %1275 = vmatprep.subr.bf16.mxu0 0
        %1276 = vmatpush1.bf16.msra.mxu0 0
        %1277 = vmatprep.subr.bf16.mxu0 0
        %1278 = vmatpush1.bf16.msra.mxu0 %v1261
        %1279 = vmatprep.subr.bf16.mxu0 0
        %1280 = vmatpush2.bf16.msra.mxu0 0
        %1281 = vmatprep.subr.bf16.mxu0 0
        %1282 = vmatpush2.bf16.msra.mxu0 0
        %1283 = vmatprep.subr.bf16.mxu0 0
        %1284 = vmatpush2.bf16.msra.mxu0 0
        %1285 = vmatprep.subr.bf16.mxu0 0
        %1286 = vmatpush2.bf16.msra.mxu0 0
        %1287 = vmatprep.subr.bf16.mxu0 0
        %1288 = vmatpush2.bf16.msra.mxu0 0
        %1289 = vmatprep.subr.bf16.mxu0 0
        %1290 = vmatpush2.bf16.msra.mxu0 0
        %1291 = vmatprep.subr.bf16.mxu0 0
        %1292 = vmatpush2.bf16.msra.mxu0 0
        %1293 = vmatprep.subr.bf16.mxu0 0
        %1294 = vmatpush2.bf16.msra.mxu0 0
        %1295 = vmatprep.mubr.bf16.mxu0 0
        %1296 = vmatmul.mubr.bf16.gmra.mxu0 %v1255
        %v1297 = vpop.f32.mrf.mxu0
        %v1298 = vadd.f32 0.0, %v1297
        %v1299 = vpop.f32.mrf.mxu0
        %v1300 = vpop.f32.mrf.mxu0
        %v1301 = vadd.f32 0.0, %v1300
        %v1302 = vpop.f32.mrf.mxu0
        %1303 = vmatprep.mubr.bf16.mxu0 0
        %1304 = vmatmul.mubr.bf16.gmra.mxu0 %v1258
        %v1305 = vpop.f32.mrf.mxu0
        %v1306 = vadd.f32 0.0, %v1305
        %v1307 = vpop.f32.mrf.mxu0
        %v1308 = vpop.f32.mrf.mxu0
        %v1309 = vadd.f32 0.0, %v1308
        %v1310 = vpop.f32.mrf.mxu0
        %1311 = vdwg.mxu0
        %v1312 = vadd.f32 %v1239, %v1298
        %v1313 = vadd.f32 %v1240, %v1301
        %v1314 = vadd.f32 %v1241, %v1306
        %v1315 = vadd.f32 %v1242, %v1309
        %v1316 = vld [vmem:[#allocation2 + $0x14] sm:$0x7]
        %s1317 = scalar_lea.vmem %s2, 52
        %v1318 = vld [vmem:[%s1317] sm:$0xf]
        %v1320 = vunpack.c.l.b16 %v1316
        %v1321 = vpack.c.b16 %v1320, %v1320
        %v1323 = vshrl.u32 %v1248, 16
        %v1325 = vrot.slane %v1323, 2
        %v1326 = vshll.u32 %v1248, 16
        %v1328 = vrot.slane %v1326, 3
        %v1329 = vor.u32 %v1325, %v1328
        %v1330 = vrot.slane %v1011, 2
        %v1331 = vrot.slane %v1007, 3
        %v1332 = vor.u32 %v1330, %v1331
        %v1333 = vsel %vm665, %v1329, %v1332
        %v1335 = vshrl.u32 %v1321, 16
        %v1337 = vrot.slane %v1335, 2
        %v1338 = vshll.u32 %v1321, 16
        %v1340 = vrot.slane %v1338, 3
        %v1341 = vor.u32 %v1337, %v1340
        %v1342 = vsel %vm665, %v1332, %v1341
        %v1344 = vsel %vm305, %v1333, 0
        %v1347 = vsel %vm305, %v1342, 0
        %v1350 = vsel %vm312, %v1318, 0
        %1352 = vmatprep.subr.bf16.mxu0 0
        %1353 = vmatpush1.bf16.msra.mxu0 0
        %1354 = vmatprep.subr.bf16.mxu0 0
        %1355 = vmatpush1.bf16.msra.mxu0 0
        %1356 = vmatprep.subr.bf16.mxu0 0
        %1357 = vmatpush1.bf16.msra.mxu0 0
        %1358 = vmatprep.subr.bf16.mxu0 0
        %1359 = vmatpush1.bf16.msra.mxu0 0
        %1360 = vmatprep.subr.bf16.mxu0 0
        %1361 = vmatpush1.bf16.msra.mxu0 0
        %1362 = vmatprep.subr.bf16.mxu0 0
        %1363 = vmatpush1.bf16.msra.mxu0 0
        %1364 = vmatprep.subr.bf16.mxu0 0
        %1365 = vmatpush1.bf16.msra.mxu0 0
        %1366 = vmatprep.subr.bf16.mxu0 0
        %1367 = vmatpush1.bf16.msra.mxu0 %v1350
        %1368 = vmatprep.subr.bf16.mxu0 0
        %1369 = vmatpush2.bf16.msra.mxu0 0
        %1370 = vmatprep.subr.bf16.mxu0 0
        %1371 = vmatpush2.bf16.msra.mxu0 0
        %1372 = vmatprep.subr.bf16.mxu0 0
        %1373 = vmatpush2.bf16.msra.mxu0 0
        %1374 = vmatprep.subr.bf16.mxu0 0
        %1375 = vmatpush2.bf16.msra.mxu0 0
        %1376 = vmatprep.subr.bf16.mxu0 0
        %1377 = vmatpush2.bf16.msra.mxu0 0
        %1378 = vmatprep.subr.bf16.mxu0 0
        %1379 = vmatpush2.bf16.msra.mxu0 0
        %1380 = vmatprep.subr.bf16.mxu0 0
        %1381 = vmatpush2.bf16.msra.mxu0 0
        %1382 = vmatprep.subr.bf16.mxu0 0
        %1383 = vmatpush2.bf16.msra.mxu0 0
        %1384 = vmatprep.mubr.bf16.mxu0 0
        %1385 = vmatmul.mubr.bf16.gmra.mxu0 %v1344
        %v1386 = vpop.f32.mrf.mxu0
        %v1387 = vadd.f32 0.0, %v1386
        %v1388 = vpop.f32.mrf.mxu0
        %v1389 = vpop.f32.mrf.mxu0
        %v1390 = vadd.f32 0.0, %v1389
        %v1391 = vpop.f32.mrf.mxu0
        %1392 = vmatprep.mubr.bf16.mxu0 0
        %1393 = vmatmul.mubr.bf16.gmra.mxu0 %v1347
        %v1394 = vpop.f32.mrf.mxu0
        %v1395 = vadd.f32 0.0, %v1394
        %v1396 = vpop.f32.mrf.mxu0
        %v1397 = vpop.f32.mrf.mxu0
        %v1398 = vadd.f32 0.0, %v1397
        %v1399 = vpop.f32.mrf.mxu0
        %1400 = vdwg.mxu0
        %v1401 = vadd.f32 %v1312, %v1387
        %v1402 = vadd.f32 %v1313, %v1390
        %v1403 = vadd.f32 %v1314, %v1395
        %v1404 = vadd.f32 %v1315, %v1398
        %v1405 = vld [vmem:[#allocation2 + $0x4] sm:$0x8]
        %s1406 = scalar_lea.vmem %s2, 56
        %v1407 = vld [vmem:[%s1406] sm:$0xf]
        %v1409 = vunpack.c.l.b16 %v1405
        %v1410 = vpack.c.b16 %v992, %v1409
        %v1411 = vrot.slane %v1410, 3
        %v1412 = vrot.slane %v997, 3
        %v1413 = vsel %vm755, %v1411, %v1412
        %v1414 = vrot.slane %v1321, 3
        %v1415 = vsel %vm755, %v1412, %v1414
        %v1417 = vsel %vm305, %v1413, 0
        %v1420 = vsel %vm305, %v1415, 0
        %v1423 = vsel %vm312, %v1407, 0
        %1425 = vmatprep.subr.bf16.mxu0 0
        %1426 = vmatpush1.bf16.msra.mxu0 0
        %1427 = vmatprep.subr.bf16.mxu0 0
        %1428 = vmatpush1.bf16.msra.mxu0 0
        %1429 = vmatprep.subr.bf16.mxu0 0
        %1430 = vmatpush1.bf16.msra.mxu0 0
        %1431 = vmatprep.subr.bf16.mxu0 0
        %1432 = vmatpush1.bf16.msra.mxu0 0
        %1433 = vmatprep.subr.bf16.mxu0 0
        %1434 = vmatpush1.bf16.msra.mxu0 0
        %1435 = vmatprep.subr.bf16.mxu0 0
        %1436 = vmatpush1.bf16.msra.mxu0 0
        %1437 = vmatprep.subr.bf16.mxu0 0
        %1438 = vmatpush1.bf16.msra.mxu0 0
        %1439 = vmatprep.subr.bf16.mxu0 0
        %1440 = vmatpush1.bf16.msra.mxu0 %v1423
        %1441 = vmatprep.subr.bf16.mxu0 0
        %1442 = vmatpush2.bf16.msra.mxu0 0
        %1443 = vmatprep.subr.bf16.mxu0 0
        %1444 = vmatpush2.bf16.msra.mxu0 0
        %1445 = vmatprep.subr.bf16.mxu0 0
        %1446 = vmatpush2.bf16.msra.mxu0 0
        %1447 = vmatprep.subr.bf16.mxu0 0
        %1448 = vmatpush2.bf16.msra.mxu0 0
        %1449 = vmatprep.subr.bf16.mxu0 0
        %1450 = vmatpush2.bf16.msra.mxu0 0
        %1451 = vmatprep.subr.bf16.mxu0 0
        %1452 = vmatpush2.bf16.msra.mxu0 0
        %1453 = vmatprep.subr.bf16.mxu0 0
        %1454 = vmatpush2.bf16.msra.mxu0 0
        %1455 = vmatprep.subr.bf16.mxu0 0
        %1456 = vmatpush2.bf16.msra.mxu0 0
        %1457 = vmatprep.mubr.bf16.mxu0 0
        %1458 = vmatmul.mubr.bf16.gmra.mxu0 %v1417
        %v1459 = vpop.f32.mrf.mxu0
        %v1460 = vadd.f32 0.0, %v1459
        %v1461 = vpop.f32.mrf.mxu0
        %v1462 = vpop.f32.mrf.mxu0
        %v1463 = vadd.f32 0.0, %v1462
        %v1464 = vpop.f32.mrf.mxu0
        %1465 = vmatprep.mubr.bf16.mxu0 0
        %1466 = vmatmul.mubr.bf16.gmra.mxu0 %v1420
        %v1467 = vpop.f32.mrf.mxu0
        %v1468 = vadd.f32 0.0, %v1467
        %v1469 = vpop.f32.mrf.mxu0
        %v1470 = vpop.f32.mrf.mxu0
        %v1471 = vadd.f32 0.0, %v1470
        %v1472 = vpop.f32.mrf.mxu0
        %1473 = vdwg.mxu0
        %v1474 = vadd.f32 %v1401, %v1460
        %v1475 = vadd.f32 %v1402, %v1463
        %v1476 = vadd.f32 %v1403, %v1468
        %v1477 = vadd.f32 %v1404, %v1471
        %v1478 = vld [vmem:[%s3] sm:$0x1]
        %v1480 = vlaneseq
        %v1481 = vshrl.u32 %v1480, 7
        %v1482 = vsub.s32 0, %v1481
        %v1483 = vrot.slane %v1478, %v1482
        %v1485 = vadd.f32 %v1474, %v1483
        %v1486 = vadd.f32 %v1475, %v1483
        %v1487 = vadd.f32 %v1476, %v1483
        %v1488 = vadd.f32 %v1477, %v1483
        %v1489 = vmul.f32 %v1485, 0.1
        %v1490 = vmul.f32 %v1486, 0.1
        %v1491 = vmul.f32 %v1487, 0.1
        %v1492 = vmul.f32 %v1488, 0.1
        %v1493 = vmax.f32 %v1485, %v1489
        %v1494 = vmax.f32 %v1486, %v1490
        %v1495 = vmax.f32 %v1487, %v1491
        %v1496 = vmax.f32 %v1488, %v1492
        %1497 = vst [vmem:[%s227] sm:$0xff] %v1493
        %1498 = vst [vmem:[%s227 + $0x8] sm:$0xff] %v1494
        %1499 = vst [vmem:[%s227 + $0x10] sm:$0xff] %v1495
        %1500 = vst [vmem:[%s227 + $0x18] sm:$0xff] %v1496
        %s1501 = sand.u32 %s128, 1
        %s1502 = scalar_lea.sflag [#allocation4], %s1501
        %s1503 = sand.u32 %s128, 1
        %s1504 = smul.addr %s1503, 32
        %s1505 = scalar_lea.vmem [#allocation3], %s1504
        // Predicated region
        $region37: #{tpu_custom_call.1} parent=35 // pred_check
          %p1506 = pneg %p138
        $region38: #{tpu_custom_call.1} parent=35 // pred_check_branch
          %1508 = sbr.rel (%p1506) target = $region40
        $region39: #{tpu_custom_call.1} parent=35 // pred_region
          %s1509 = smul.u32 4, %s18
          %s1511 = ssub.s32 512, 512
          %1512 = vsyncadd %s1502, %s1511
          %s1513 = smul.addr %s1509, 128
          %s1514 = scalar_lea.hbm %s4, %s1513
          %s1515 = sshll.u32 %s1505, 4
          %s1516 = int_to_ptr.vmem [resolvable:$true] %s1515
          %1521 = dma.vmem_to_hbm [thread:$0]  %s1516, 512, %s1514, %s1502, 128, 128, 8
        $region40: #{tpu_custom_call.1} parent=35 // pred_fallthru
          _
      $region36: #{tpu_custom_call.1} parent=5 // pred_fallthru
        _
      %p1522 = scmp.le.s32.totalorder 2, %s13
      // Predicated region
      $region41: #{tpu_custom_call.1} parent=5 // pred_check
        %p1523 = pneg %p1522
      $region42: #{tpu_custom_call.1} parent=5 // pred_check_branch
        %1525 = sbr.rel (%p1523) target = $region44
      $region43: #{tpu_custom_call.1} parent=5 // pred_region
        %s1526 = ssub.s32 %s13, 2
        // Predicated region
        $region45: #{tpu_custom_call.1} parent=43 // pred_check
          %p1527 = pneg %p144
        $region46: #{tpu_custom_call.1} parent=43 // pred_check_branch
          %1529 = sbr.rel (%p1527) target = $region48
        $region47: #{tpu_custom_call.1} parent=43 // pred_region
          %s1530 = sand.u32 %s129, 1
          %s1531 = scalar_lea.sflag [#allocation4], %s1530
          %s1532 = sand.u32 %s129, 1
          %s1533 = smul.addr %s1532, 32
          %s1534 = scalar_lea.vmem [#allocation3], %s1533
          %1535 = dma.done %s1531, 512
        $region48: #{tpu_custom_call.1} parent=43 // pred_fallthru
          _
      $region44: #{tpu_custom_call.1} parent=5 // pred_fallthru
        _
    $region6: #{tpu_custom_call.1} parent=1 // loop_footer
      %s17 = sadd.s32 1, %s13
    $region7: #{tpu_custom_call.1} parent=1 // loop_footer_branch
      %12 = sbr.rel target = $region3
    $region8: #{tpu_custom_call.1} parent=1 // loop_exit
      _
    %1536 = vsyncpa [#allocation4], 1
    %s1537 = scalar_lea.sflag [#allocation4], 1
    %1538 = vsyncpa %s1537, 1

</llo_original>
